<compile_context>
chip_gen: v7x
topology: tpu7x:2x2x1
jax: 0.10.0
libtpu: 0.0.40
codegen_flags: <defaults>
</compile_context>

<pallas_src>
import jax
import jax.numpy as jnp
from jax import lax
from jax.experimental import pallas as pl
from jax.experimental.pallas import tpu as pltpu


_MAX_SEQ_TILE = 4096   # multiple of 16; ~20-25 MiB worst-case VMEM at dim=128/f32


def _make_rope_kernel(half, packed):
    dim = 2 * half

    def kernel(pos_ref, inv_ref, cos_ref, sin_ref):
        # pos_ref: (1, tS, 1) f32  (sequence on sublanes -> free column slices)
        # inv_ref: (1, dim)   f32  (= concat(inv_freq, inv_freq), VMEM-resident)
        # cos_ref / sin_ref: (1, tS, dim) in the output dtype
        inv2 = inv_ref[...]                                   # (1, dim)

        if packed:
            tS = cos_ref.shape[1]
            hS = tS // 2
            # Pack rows [0, hS) into lanes [0, half) and rows [hS, tS) into
            # lanes [half, dim): every lane of `freqs` is unique, so cos/sin run
            # on half the vregs at full lane occupancy.
            pos_lo = pos_ref[0, :hS, :]                       # (hS, 1)
            pos_hi = pos_ref[0, hS:, :]                       # (hS, 1)
            lane = lax.broadcasted_iota(jnp.int32, (hS, dim), 1)
            in_lo = lane < half
            freqs = jnp.where(in_lo, pos_lo, pos_hi) * inv2   # (hS, dim) f32
            c = jnp.cos(freqs)
            s = jnp.sin(freqs)
            # Swap the two lane halves (XLU slot is otherwise idle).
            c_sw = pltpu.roll(c, shift=half, axis=1)
            s_sw = pltpu.roll(s, shift=half, axis=1)
            # Rebuild emb = cat(freqs_row, freqs_row) for both row blocks and
            # write with lane-dense, contiguous sublane-range stores.
            cos_ref[0, :hS, :] = jnp.where(in_lo, c, c_sw).astype(cos_ref.dtype)
            cos_ref[0, hS:, :] = jnp.where(in_lo, c_sw, c).astype(cos_ref.dtype)
            sin_ref[0, :hS, :] = jnp.where(in_lo, s, s_sw).astype(sin_ref.dtype)
            sin_ref[0, hS:, :] = jnp.where(in_lo, s_sw, s).astype(sin_ref.dtype)
        else:
            # Fallback (odd tile or dim not a multiple of 128): duplicated lanes.
            emb = pos_ref[...] * inv2[:, None, :]             # (1, tS, dim)
            cos_ref[...] = jnp.cos(emb).astype(cos_ref.dtype)
            sin_ref[...] = jnp.sin(emb).astype(sin_ref.dtype)

    return kernel


def _pick_seq_tile(S, B):
    tS = min(S, _MAX_SEQ_TILE)
    if B == 1 and S > 32:
        # Guarantee >= 2 grid steps so both v7x TensorCores get sharded work.
        half_s = -(-S // 2)
        half_s = -(-half_s // 16) * 16
        tS = min(tS, half_s)
    if tS < S:
        # Non-full S tiles must be sublane-divisible (multiple of 8); use 16 so
        # the packed row-pair split stays even.
        tS = min(-(-tS // 16) * 16, S)
    return tS


def qwen2_rotary_embedding(x, position_ids, inv_freq):
    """Pallas port of Qwen2RotaryEmbedding_streaming.forward.

    Returns (cos, sin), each of shape (B, S, dim) with dtype x.dtype.
    """
    B, S = position_ids.shape
    half = inv_freq.shape[0]
    dim = 2 * half
    out_dtype = x.dtype

    # Wrapper-side layout plumbing (no compute hoisting):
    #   positions as a (B, S, 1) f32 column -> free static sublane slices in-kernel;
    #   inv_freq duplicated once to the full head dim.
    pos_f = position_ids.astype(jnp.float32).reshape(B, S, 1)
    inv_f = inv_freq.astype(jnp.float32)
    inv_dup = jnp.concatenate([inv_f, inv_f], axis=0)[None, :]        # (1, dim)

    tS = _pick_seq_tile(S, B)
    # Deduplicated path needs an even tile and 128-lane-aligned dim so the
    # pltpu.roll is a plain full-vreg lane rotate.
    packed = (tS % 2 == 0) and (dim % 128 == 0)

    grid = (B, pl.cdiv(S, tS))

    out_shape = (
        jax.ShapeDtypeStruct((B, S, dim), out_dtype),
        jax.ShapeDtypeStruct((B, S, dim), out_dtype),
    )

    grid_spec = pltpu.PrefetchScalarGridSpec(
        num_scalar_prefetch=0,
        grid=grid,
        in_specs=[
            # TODO(synk): a (B, S) lane-major pos block would make this DMA one
            # contiguous burst; kept as sublane columns because the packed path
            # slices them for free and the traffic is tiny.
            pl.BlockSpec((1, tS, 1), lambda b, s: (b, s, 0)),
            # Constant index_map keeps the tiny inv table VMEM-resident.
            pl.BlockSpec((1, dim), lambda b, s: (0, 0)),
        ],
        out_specs=[
            pl.BlockSpec((1, tS, dim), lambda b, s: (b, s, 0)),
            pl.BlockSpec((1, tS, dim), lambda b, s: (b, s, 0)),
        ],
    )

    out_bytes = 2 * B * S * dim * jnp.dtype(out_dtype).itemsize
    in_bytes = B * S * 4 + dim * 4
    cost = pl.CostEstimate(
        flops=B * S * dim,                 # outer-product multiplies
        transcendentals=B * S * dim,       # cos + sin on the unique half-width freqs
        bytes_accessed=out_bytes + in_bytes,
    )

    cos, sin = pl.pallas_call(
        _make_rope_kernel(half, packed),
        out_shape=out_shape,
        grid_spec=grid_spec,
        compiler_params=pltpu.CompilerParams(
            dimension_semantics=("parallel", "parallel"),
            vmem_limit_bytes=48 * 1024 * 1024,
        ),
        cost_estimate=cost,
    )(pos_f, inv_dup)
    return cos, sin


def make_inv_freq(dim, base=10000.0):
    # inv_freq = 1 / base^(arange(0, dim, 2) / dim)
    exponents = jnp.arange(0, dim, 2, dtype=jnp.float32) / float(dim)
    return 1.0 / (base ** exponents)


def reference(x, position_ids, inv_freq):
    pos = position_ids.astype(jnp.float32)
    freqs = pos[:, :, None] * inv_freq[None, None, :]
    emb = jnp.concatenate([freqs, freqs], axis=-1)
    return jnp.cos(emb).astype(x.dtype), jnp.sin(emb).astype(x.dtype)


if __name__ == "__main__":
    key = jax.random.PRNGKey(0)
    # Small but representative shapes: Qwen2 attention uses head_dim = 128.
    B, S, H, D = 2, 128, 4, 128
    dim = D

    kx, _ = jax.random.split(key)
    # x is only used for dtype/device in the original module.
    x = jax.random.normal(kx, (B, H, S, D), dtype=jnp.float32)
    position_ids = jnp.broadcast_to(jnp.arange(S, dtype=jnp.int32)[None, :], (B, S))
    inv_freq = make_inv_freq(dim)

    # Packed (deduplicated) path: dim % 128 == 0.
    cos, sin = qwen2_rotary_embedding(x, position_ids, inv_freq)
    cos, sin = jax.block_until_ready((cos, sin))
    cos_ref, sin_ref = reference(x, position_ids, inv_freq)
    assert cos.shape == (B, S, dim) and sin.shape == (B, S, dim)
    assert cos.dtype == x.dtype and sin.dtype == x.dtype
    assert jnp.allclose(cos, cos_ref, atol=1e-5, rtol=1e-5)
    assert jnp.allclose(sin, sin_ref, atol=1e-5, rtol=1e-5)

    # Fallback path: small head dim (not a multiple of 128).
    dim2 = 32
    inv_freq2 = make_inv_freq(dim2)
    x2 = jax.random.normal(kx, (B, H, S, dim2), dtype=jnp.float32)
    cos2, sin2 = qwen2_rotary_embedding(x2, position_ids, inv_freq2)
    cos2, sin2 = jax.block_until_ready((cos2, sin2))
    cos2_ref, sin2_ref = reference(x2, position_ids, inv_freq2)
    assert jnp.allclose(cos2, cos2_ref, atol=1e-5, rtol=1e-5)
    assert jnp.allclose(sin2, sin2_ref, atol=1e-5, rtol=1e-5)

    print("KERNEL_OK")
</pallas_src>

<mosaic_0001>
module attributes {stable_mosaic.version = 11 : i64} {
  func.func @kernel(%arg0: i32, %arg1: i32, %arg2: memref<1x128x1xf32, #tpu.memory_space<vmem>>, %arg3: memref<1x128xf32, #tpu.memory_space<vmem>>, %arg4: memref<1x128x128xf32, #tpu.memory_space<vmem>>, %arg5: memref<1x128x128xf32, #tpu.memory_space<vmem>>) attributes {dimension_semantics = [#tpu.dimension_semantics<parallel>, #tpu.dimension_semantics<parallel>], iteration_bounds = array<i64: 2, 1>, scalar_prefetch = 0 : i64, scratch_operands = 0 : i64, tpu.core_type = #tpu.core_type<tc>, window_params = [{transform_indices = @transform_0, window_bounds = array<i64: 1, 128, 1>}, {pipeline_mode = #tpu.pipeline_mode<synchronous>, transform_indices = @transform_1, window_bounds = array<i64: 1, 128>}, {transform_indices = @transform_2, window_bounds = array<i64: 1, 128, 128>}, {transform_indices = @transform_3, window_bounds = array<i64: 1, 128, 128>}]} {
    %c0 = arith.constant 0 : index
    %c0_0 = arith.constant 0 : index
    %0 = vector.load %arg3[%c0, %c0_0] : memref<1x128xf32, #tpu.memory_space<vmem>>, vector<1x128xf32>
    %c0_1 = arith.constant 0 : index
    %c0_2 = arith.constant 0 : index
    %c0_3 = arith.constant 0 : index
    %1 = vector.load %arg2[%c0_1, %c0_2, %c0_3] : memref<1x128x1xf32, #tpu.memory_space<vmem>>, vector<1x64x1xf32>
    %2 = vector.shape_cast %1 : vector<1x64x1xf32> to vector<64x1xf32>
    %c0_4 = arith.constant 0 : index
    %c64 = arith.constant 64 : index
    %c0_5 = arith.constant 0 : index
    %3 = vector.load %arg2[%c0_4, %c64, %c0_5] : memref<1x128x1xf32, #tpu.memory_space<vmem>>, vector<1x64x1xf32>
    %4 = vector.shape_cast %3 : vector<1x64x1xf32> to vector<64x1xf32>
    %5 = tpu.iota {dimensions = array<i32: 1>} : vector<64x128xi32>
    %c64_i32 = arith.constant 64 : i32
    %6 = vector.broadcast %c64_i32 : i32 to vector<64x128xi32>
    %7 = arith.cmpi slt, %5, %6 : vector<64x128xi32>
    %8 = vector.shape_cast %2 : vector<64x1xf32> to vector<64x1xf32>
    %9 = vector.broadcast %8 : vector<64x1xf32> to vector<64x128xf32>
    %10 = vector.shape_cast %4 : vector<64x1xf32> to vector<64x1xf32>
    %11 = vector.broadcast %10 : vector<64x1xf32> to vector<64x128xf32>
    %12 = arith.select %7, %9, %11 : vector<64x128xi1>, vector<64x128xf32>
    %13 = vector.broadcast %0 : vector<1x128xf32> to vector<64x128xf32>
    %14 = arith.mulf %12, %13 : vector<64x128xf32>
    %15 = math.cos %14 : vector<64x128xf32>
    %16 = math.sin %14 : vector<64x128xf32>
    %c64_i32_6 = arith.constant 64 : i32
    %17 = tpu.dynamic_rotate %15 by %c64_i32_6 dim 1 : vector<64x128xf32>, i32 -> vector<64x128xf32>
    %c64_i32_7 = arith.constant 64 : i32
    %18 = tpu.dynamic_rotate %16 by %c64_i32_7 dim 1 : vector<64x128xf32>, i32 -> vector<64x128xf32>
    %19 = arith.select %7, %15, %17 : vector<64x128xi1>, vector<64x128xf32>
    %c0_8 = arith.constant 0 : index
    %c0_9 = arith.constant 0 : index
    %c0_10 = arith.constant 0 : index
    %20 = vector.load %arg4[%c0_8, %c0_9, %c0_10] : memref<1x128x128xf32, #tpu.memory_space<vmem>>, vector<1x64x128xf32>
    %21 = vector.shape_cast %20 : vector<1x64x128xf32> to vector<64x128xf32>
    %22 = vector.shape_cast %19 : vector<64x128xf32> to vector<1x64x128xf32>
    tpu.vector_store %arg4[%c0_8, %c0_9, %c0_10], %22 {strides = array<i32>} : memref<1x128x128xf32, #tpu.memory_space<vmem>>, vector<1x64x128xf32>,
    %23 = arith.select %7, %17, %15 : vector<64x128xi1>, vector<64x128xf32>
    %c0_11 = arith.constant 0 : index
    %c64_12 = arith.constant 64 : index
    %c0_13 = arith.constant 0 : index
    %24 = vector.load %arg4[%c0_11, %c64_12, %c0_13] : memref<1x128x128xf32, #tpu.memory_space<vmem>>, vector<1x64x128xf32>
    %25 = vector.shape_cast %24 : vector<1x64x128xf32> to vector<64x128xf32>
    %26 = vector.shape_cast %23 : vector<64x128xf32> to vector<1x64x128xf32>
    tpu.vector_store %arg4[%c0_11, %c64_12, %c0_13], %26 {strides = array<i32>} : memref<1x128x128xf32, #tpu.memory_space<vmem>>, vector<1x64x128xf32>,
    %27 = arith.select %7, %16, %18 : vector<64x128xi1>, vector<64x128xf32>
    %c0_14 = arith.constant 0 : index
    %c0_15 = arith.constant 0 : index
    %c0_16 = arith.constant 0 : index
    %28 = vector.load %arg5[%c0_14, %c0_15, %c0_16] : memref<1x128x128xf32, #tpu.memory_space<vmem>>, vector<1x64x128xf32>
    %29 = vector.shape_cast %28 : vector<1x64x128xf32> to vector<64x128xf32>
    %30 = vector.shape_cast %27 : vector<64x128xf32> to vector<1x64x128xf32>
    tpu.vector_store %arg5[%c0_14, %c0_15, %c0_16], %30 {strides = array<i32>} : memref<1x128x128xf32, #tpu.memory_space<vmem>>, vector<1x64x128xf32>,
    %31 = arith.select %7, %18, %16 : vector<64x128xi1>, vector<64x128xf32>
    %c0_17 = arith.constant 0 : index
    %c64_18 = arith.constant 64 : index
    %c0_19 = arith.constant 0 : index
    %32 = vector.load %arg5[%c0_17, %c64_18, %c0_19] : memref<1x128x128xf32, #tpu.memory_space<vmem>>, vector<1x64x128xf32>
    %33 = vector.shape_cast %32 : vector<1x64x128xf32> to vector<64x128xf32>
    %34 = vector.shape_cast %31 : vector<64x128xf32> to vector<1x64x128xf32>
    tpu.vector_store %arg5[%c0_17, %c64_18, %c0_19], %34 {strides = array<i32>} : memref<1x128x128xf32, #tpu.memory_space<vmem>>, vector<1x64x128xf32>,
    return
  }
  func.func @transform_0(%arg0: i32, %arg1: i32) -> (i32, i32, i32) {
    %c0_i32 = arith.constant 0 : i32
    %c0_i32_0 = arith.constant 0 : i32
    return %arg0, %arg1, %c0_i32 : i32, i32, i32
  }
  func.func @transform_1(%arg0: i32, %arg1: i32) -> (i32, i32) {
    %c0_i32 = arith.constant 0 : i32
    %c0_i32_0 = arith.constant 0 : i32
    %c0_i32_1 = arith.constant 0 : i32
    return %c0_i32, %c0_i32_0 : i32, i32
  }
  func.func @transform_2(%arg0: i32, %arg1: i32) -> (i32, i32, i32) {
    %c0_i32 = arith.constant 0 : i32
    %c0_i32_0 = arith.constant 0 : i32
    return %arg0, %arg1, %c0_i32 : i32, i32, i32
  }
  func.func @transform_3(%arg0: i32, %arg1: i32) -> (i32, i32, i32) {
    %c0_i32 = arith.constant 0 : i32
    %c0_i32_0 = arith.constant 0 : i32
    return %arg0, %arg1, %c0_i32 : i32, i32, i32
  }
}

</mosaic_0001>

<llo_original>
// kernel: tpu_custom_call.1
$region0: #{tpu_custom_call.1}
  #allocation0 [shape = 'u32[]', space=smem, size = 0x4, offset = 0x4, fixed_abs, tag = 'smem constant byte address 0x4 - core index']
  #allocation1 [shape = 'u32[144,128]{1,0:T(1,128)}', space=vmem, size = 0x12000, scoped, tag = 'internal scratch']
  %s0 = inlined_call_operand.vmem [shape: f32[2,128,1], index: 0, kind: input, shape index: {}]
  %s1 = inlined_call_operand.vmem [shape: f32[1,128], index: 1, kind: input, shape index: {}]
  %s2 = inlined_call_operand.hbm [shape: f32[2,128,128], index: 2, kind: output, shape index: {0}]
  %s3 = inlined_call_operand.hbm [shape: f32[2,128,128], index: 3, kind: output, shape index: {1}]
  %4 = xla_tuple %s2, %s3
  %s5 = sld [smem:[#allocation0]]
  $region49: #{tpu_custom_call.1} parent=0
    _
  %s7 = ssub.s32 1, %s5
  %s8 = scalar_select 0, %s7, %s5
  $region1: #{tpu_custom_call.1} parent=0
    #allocation2 [shape = 'u8[131072]{0}', space=vmem, size = 0x20000, scoped, tag = 'output window, operand 0']
    #allocation3 [shape = 's32[2]{0}', space=sflag, size = 0x8, scoped, tag = 'scoped memory for tpu_custom_call.1']
    #allocation4 [shape = 'u8[131072]{0}', space=vmem, size = 0x20000, scoped, tag = 'output window, operand 1']
    #allocation5 [shape = 's32[2]{0}', space=sflag, size = 0x8, scoped, tag = 'scoped memory for tpu_custom_call.1']
    %9 = vsyncpa [#allocation3], 0
    %s10 = scalar_lea.sflag [#allocation3], 1
    %11 = vsyncpa %s10, 0
    %12 = vsyncpa [#allocation5], 0
    %s13 = scalar_lea.sflag [#allocation5], 1
    %14 = vsyncpa %s13, 0
    loop: start=0, step=1, limit=4
    $region2: #{tpu_custom_call.1} parent=1 // loop_pre_header
      _
    $region3: #{tpu_custom_call.1} parent=1 // loop_header
      %s16 = sphi 0, %s20
      %p17 = scmp.ge.s32.totalorder %s16, 4
      %s23 = sphi 0, %s35
      %s24 = sphi 0, %s31
      %s25 = sphi 0, %s23
      %s26 = sphi 0, %s24
      %s27 = sphi 0, %s25
      %s28 = sphi 0, %s26
      %s40 = sphi 0, %s42
      %s43 = sphi 0, %s40
      %s44 = sphi 0, %s43
      %s60 = sphi 0, %s44
      %s64 = sphi 0, %s64
      %s66 = sphi 0, %s64
      %s67 = sphi 0, %s66
      %s81 = sphi 0, %s67
      %s89 = sphi 0, %s91
      %s92 = sphi 0, %s89
      %s93 = sphi 0, %s92
      %s109 = sphi 0, %s93
      %s117 = sphi 0, %s119
      %s120 = sphi 0, %s117
      %s121 = sphi 0, %s120
      %s137 = sphi 0, %s121
    $region4: #{tpu_custom_call.1} parent=1 // loop_header_branch
      %19 = sbr.rel (%p17) target = $region8
    $region5: #{tpu_custom_call.1} parent=1 // loop_body
      %s21 = ssub.s32 %s16, 1
      %s22 = ssub.s32 %s16, 2
      %s29 = sadd.s32 1, %s24
      %p30 = scmp.ge.s32.totalorder %s29, 1
      %s31 = scalar_select %p30, 0, %s29
      %s32 = sadd.s32 1, %s23
      %s33 = scalar_select %p30, %s32, %s23
      %p34 = scmp.ge.s32.totalorder %s33, 2
      %s35 = scalar_select %p34, 0, %s33
      %s36 = ssub.s32 %s23, %s35
      %s37 = ssub.s32 %s24, %s31
      %s38 = sor.u32 %s36, %s37
      %p39 = scmp.eq.s32.totalorder %s38, 0
      %s41 = sadd.s32 %s40, 1
      %s42 = scalar_select %p39, %s40, %s41
      %p45 = pneg %p39
      %p46 = scmp.eq.s32.totalorder %s16, 1
      %p47 = por %p45, %p46
      %p48 = scmp.ne.s32.totalorder %s40, %s43
      %p49 = scmp.eq.s32.totalorder %s16, 0
      %p50 = por %p48, %p49
      %p51 = scmp.ne.s32.totalorder %s40, %s43
      %p52 = scmp.eq.s32.totalorder %s21, 1
      %p53 = por %p51, %p52
      %p54 = scmp.ne.s32.totalorder %s43, %s44
      %p55 = scmp.eq.s32.totalorder %s21, 0
      %p56 = por %p54, %p55
      %p57 = scmp.ne.s32.totalorder %s43, %s44
      %p58 = scmp.eq.s32.totalorder %s22, 1
      %p59 = por %p57, %p58
      %p61 = scmp.ne.s32.totalorder %s44, %s60
      %p62 = scmp.eq.s32.totalorder %s22, 0
      %p63 = por %p61, %p62
      %s65 = sadd.s32 %s64, 1
      %p68 = scmp.eq.s32.totalorder %s16, 1
      %p69 = scmp.ne.s32.totalorder %s64, %s66
      %p70 = scmp.eq.s32.totalorder %s16, 0
      %p71 = por %p69, %p70
      %p72 = scmp.ne.s32.totalorder %s64, %s66
      %p73 = scmp.eq.s32.totalorder %s21, 1
      %p74 = por %p72, %p73
      %p75 = scmp.ne.s32.totalorder %s66, %s67
      %p76 = scmp.eq.s32.totalorder %s21, 0
      %p77 = por %p75, %p76
      %p78 = scmp.ne.s32.totalorder %s66, %s67
      %p79 = scmp.eq.s32.totalorder %s22, 1
      %p80 = por %p78, %p79
      %p82 = scmp.ne.s32.totalorder %s67, %s81
      %p83 = scmp.eq.s32.totalorder %s22, 0
      %p84 = por %p82, %p83
      %s85 = ssub.s32 %s23, %s35
      %s86 = ssub.s32 %s24, %s31
      %s87 = sor.u32 %s85, %s86
      %p88 = scmp.eq.s32.totalorder %s87, 0
      %s90 = sadd.s32 %s89, 1
      %s91 = scalar_select %p88, %s89, %s90
      %p94 = pneg %p88
      %p95 = scmp.eq.s32.totalorder %s16, 1
      %p96 = por %p94, %p95
      %p97 = scmp.ne.s32.totalorder %s89, %s92
      %p98 = scmp.eq.s32.totalorder %s16, 0
      %p99 = por %p97, %p98
      %p100 = scmp.ne.s32.totalorder %s89, %s92
      %p101 = scmp.eq.s32.totalorder %s21, 1
      %p102 = por %p100, %p101
      %p103 = scmp.ne.s32.totalorder %s92, %s93
      %p104 = scmp.eq.s32.totalorder %s21, 0
      %p105 = por %p103, %p104
      %p106 = scmp.ne.s32.totalorder %s92, %s93
      %p107 = scmp.eq.s32.totalorder %s22, 1
      %p108 = por %p106, %p107
      %p110 = scmp.ne.s32.totalorder %s93, %s109
      %p111 = scmp.eq.s32.totalorder %s22, 0
      %p112 = por %p110, %p111
      %s113 = ssub.s32 %s23, %s35
      %s114 = ssub.s32 %s24, %s31
      %s115 = sor.u32 %s113, %s114
      %p116 = scmp.eq.s32.totalorder %s115, 0
      %s118 = sadd.s32 %s117, 1
      %s119 = scalar_select %p116, %s117, %s118
      %p122 = pneg %p116
      %p123 = scmp.eq.s32.totalorder %s16, 1
      %p124 = por %p122, %p123
      %p125 = scmp.ne.s32.totalorder %s117, %s120
      %p126 = scmp.eq.s32.totalorder %s16, 0
      %p127 = por %p125, %p126
      %p128 = scmp.ne.s32.totalorder %s117, %s120
      %p129 = scmp.eq.s32.totalorder %s21, 1
      %p130 = por %p128, %p129
      %p131 = scmp.ne.s32.totalorder %s120, %s121
      %p132 = scmp.eq.s32.totalorder %s21, 0
      %p133 = por %p131, %p132
      %p134 = scmp.ne.s32.totalorder %s120, %s121
      %p135 = scmp.eq.s32.totalorder %s22, 1
      %p136 = por %p134, %p135
      %p138 = scmp.ne.s32.totalorder %s121, %s137
      %p139 = scmp.eq.s32.totalorder %s22, 0
      %p140 = por %p138, %p139
      %p141 = scmp.le.s32.totalorder 1, %s16
      %p142 = scmp.lt.s32.totalorder %s16, 3
      %p143 = pnand %p141, %p142
      %p144 = pneg %p143
      // Predicated region
      $region9: #{tpu_custom_call.1} parent=5 // pred_check
        _
      $region10: #{tpu_custom_call.1} parent=5 // pred_check_branch
        %146 = sbr.rel (%p143) target = $region12
      $region11: #{tpu_custom_call.1} parent=5 // pred_region
        %s147 = ssub.s32 %s16, 1
        // Predicated region
        $region13: #{tpu_custom_call.1} parent=11 // pred_check
          %p148 = pneg %p77
        $region14: #{tpu_custom_call.1} parent=11 // pred_check_branch
          %150 = sbr.rel (%p148) target = $region16
        $region15: #{tpu_custom_call.1} parent=11 // pred_region
          _
        $region16: #{tpu_custom_call.1} parent=11 // pred_fallthru
          _
      $region12: #{tpu_custom_call.1} parent=5 // pred_fallthru
        _
      %p151 = scmp.lt.s32.totalorder %s16, 2
      // Predicated region
      $region17: #{tpu_custom_call.1} parent=5 // pred_check
        %p152 = pneg %p151
      $region18: #{tpu_custom_call.1} parent=5 // pred_check_branch
        %154 = sbr.rel (%p152) target = $region20
      $region19: #{tpu_custom_call.1} parent=5 // pred_region
        // Predicated region
        $region21: #{tpu_custom_call.1} parent=19 // pred_check
          %p155 = pneg %p50
        $region22: #{tpu_custom_call.1} parent=19 // pred_check_branch
          %157 = sbr.rel (%p155) target = $region24
        $region23: #{tpu_custom_call.1} parent=19 // pred_region
          %s158 = smul.u32 16, %s24
          %p159 = scmp.lt.s32.totalorder %s23, 1
          %s160 = scalar_select %p159, %s23, 1
          %p161 = scmp.lt.s32.totalorder %s158, 15
          %s162 = scalar_select %p161, %s158, 15
          %s163 = smul.addr %s160, 16
          %s164 = sadd.s32 %s162, %s163
          %s165 = smul.addr %s164, 8
          %s166 = scalar_lea.vmem %s0, %s165
          %s167 = smul.u32 16, %s24
        $region24: #{tpu_custom_call.1} parent=19 // pred_fallthru
          _
      $region20: #{tpu_custom_call.1} parent=5 // pred_fallthru
        _
      %p168 = scmp.le.s32.totalorder 1, %s16
      %p169 = scmp.lt.s32.totalorder %s16, 3
      %p170 = pnand %p168, %p169
      %p171 = pneg %p170
      // Predicated region
      $region25: #{tpu_custom_call.1} parent=5 // pred_check
        _
      $region26: #{tpu_custom_call.1} parent=5 // pred_check_branch
        %173 = sbr.rel (%p170) target = $region28
      $region27: #{tpu_custom_call.1} parent=5 // pred_region
        %s174 = ssub.s32 %s16, 1
        %s175 = smul.u32 16, %s26
        %p176 = scmp.lt.s32.totalorder %s25, 1
        %s177 = scalar_select %p176, %s25, 1
        %p178 = scmp.lt.s32.totalorder %s175, 15
        %s179 = scalar_select %p178, %s175, 15
        %s180 = smul.addr %s177, 16
        %s181 = sadd.s32 %s179, %s180
        %s182 = smul.addr %s181, 8
        %s183 = scalar_lea.vmem %s0, %s182
        %p184 = pneg %p56
        %p185 = pneg %p53
        %p186 = pneg %p77
        %p187 = pneg %p74
        %p188 = pneg %p105
        %p189 = pneg %p102
        %s190 = sand.u32 %s92, 1
        %s191 = scalar_lea.sflag [#allocation3], %s190
        %s192 = sand.u32 %s92, 1
        %s193 = smul.addr %s192, 128
        %s194 = scalar_lea.vmem [#allocation2], %s193
        %p195 = pneg %p133
        %p196 = pneg %p130
        %s197 = sand.u32 %s120, 1
        %s198 = scalar_lea.sflag [#allocation5], %s197
        %s199 = sand.u32 %s120, 1
        %s200 = smul.addr %s199, 128
        %s201 = scalar_lea.vmem [#allocation4], %s200
        %s202 = smul.u32 16, %s26
        %p203 = scmp.lt.s32.totalorder %s25, 1
        %s204 = scalar_select %p203, %s25, 1
        %p205 = scmp.lt.s32.totalorder %s202, 15
        %s206 = scalar_select %p205, %s202, 15
        %s207 = smul.addr %s204, 16
        %s208 = sadd.s32 %s206, %s207
        %s209 = smul.addr %s208, 8
        %s210 = scalar_lea.vmem %s0, %s209
        %s211 = smul.u32 16, %s26
        %s212 = smul.u32 16, %s26
        %s213 = smul.u32 16, %s26
        %v214 = vld [vmem:[%s1] sm:$0x1]
        %v215 = vld [vmem:[%s210] sm:$0xff]
        %v216 = vld [vmem:[%s210 + $0x8] sm:$0xff]
        %v217 = vld [vmem:[%s210 + $0x10] sm:$0xff]
        %v218 = vld [vmem:[%s210 + $0x18] sm:$0xff]
        %v219 = vld [vmem:[%s210 + $0x20] sm:$0xff]
        %v220 = vld [vmem:[%s210 + $0x28] sm:$0xff]
        %v221 = vld [vmem:[%s210 + $0x30] sm:$0xff]
        %v222 = vld [vmem:[%s210 + $0x38] sm:$0xff]
        %v223 = vld [vmem:[%s210 + $0x40] sm:$0xff]
        %v224 = vld [vmem:[%s210 + $0x48] sm:$0xff]
        %v225 = vld [vmem:[%s210 + $0x50] sm:$0xff]
        %v226 = vld [vmem:[%s210 + $0x58] sm:$0xff]
        %v227 = vld [vmem:[%s210 + $0x60] sm:$0xff]
        %v228 = vld [vmem:[%s210 + $0x68] sm:$0xff]
        %v229 = vld [vmem:[%s210 + $0x70] sm:$0xff]
        %v230 = vld [vmem:[%s210 + $0x78] sm:$0xff]
        %v231 = vlaneseq
        %v232 = vand.u32 %v231, 127
        %vm233 = vcmp.lt.s32.totalorder %v232, 64
        %235 = vset.pattern.permute.xlu0 0
        %236 = vperm.xlu0 %235, %v215
        %v237 = vpop.permute.xlu0 %236
        %240 = vset.pattern.permute.xlu0 0
        %241 = vperm.xlu0 %240, %v216
        %v242 = vpop.permute.xlu0 %241
        %245 = vset.pattern.permute.xlu0 0
        %246 = vperm.xlu0 %245, %v217
        %v247 = vpop.permute.xlu0 %246
        %250 = vset.pattern.permute.xlu0 0
        %251 = vperm.xlu0 %250, %v218
        %v252 = vpop.permute.xlu0 %251
        %255 = vset.pattern.permute.xlu0 0
        %256 = vperm.xlu0 %255, %v219
        %v257 = vpop.permute.xlu0 %256
        %260 = vset.pattern.permute.xlu0 0
        %261 = vperm.xlu0 %260, %v220
        %v262 = vpop.permute.xlu0 %261
        %265 = vset.pattern.permute.xlu0 0
        %266 = vperm.xlu0 %265, %v221
        %v267 = vpop.permute.xlu0 %266
        %270 = vset.pattern.permute.xlu0 0
        %271 = vperm.xlu0 %270, %v222
        %v272 = vpop.permute.xlu0 %271
        %275 = vset.pattern.permute.xlu0 0
        %276 = vperm.xlu0 %275, %v223
        %v277 = vpop.permute.xlu0 %276
        %280 = vset.pattern.permute.xlu0 0
        %281 = vperm.xlu0 %280, %v224
        %v282 = vpop.permute.xlu0 %281
        %285 = vset.pattern.permute.xlu0 0
        %286 = vperm.xlu0 %285, %v225
        %v287 = vpop.permute.xlu0 %286
        %290 = vset.pattern.permute.xlu0 0
        %291 = vperm.xlu0 %290, %v226
        %v292 = vpop.permute.xlu0 %291
        %295 = vset.pattern.permute.xlu0 0
        %296 = vperm.xlu0 %295, %v227
        %v297 = vpop.permute.xlu0 %296
        %300 = vset.pattern.permute.xlu0 0
        %301 = vperm.xlu0 %300, %v228
        %v302 = vpop.permute.xlu0 %301
        %305 = vset.pattern.permute.xlu0 0
        %306 = vperm.xlu0 %305, %v229
        %v307 = vpop.permute.xlu0 %306
        %310 = vset.pattern.permute.xlu0 0
        %311 = vperm.xlu0 %310, %v230
        %v312 = vpop.permute.xlu0 %311
        %v314 = vsel %vm233, %v237, %v277
        %v315 = vsel %vm233, %v242, %v282
        %v316 = vsel %vm233, %v247, %v287
        %v317 = vsel %vm233, %v252, %v292
        %v318 = vsel %vm233, %v257, %v297
        %v319 = vsel %vm233, %v262, %v302
        %v320 = vsel %vm233, %v267, %v307
        %v321 = vsel %vm233, %v272, %v312
        %v323 = vlaneseq
        %v324 = vshrl.u32 %v323, 7
        %v325 = vsub.s32 0, %v324
        %v326 = vrot.slane %v214, %v325
        %v328 = vmul.f32 %v314, %v326
        %v329 = vmul.f32 %v315, %v326
        %v330 = vmul.f32 %v316, %v326
        %v331 = vmul.f32 %v317, %v326
        %v332 = vmul.f32 %v318, %v326
        %v333 = vmul.f32 %v319, %v326
        %v334 = vmul.f32 %v320, %v326
        %v335 = vmul.f32 %v321, %v326
        %v336 = vand.u32 2147483647, %v328
        %vm337 = vcmp.le.f32.partialorder %v336, 0.7853982
        %vm338 = vcmp.lt.s32.totalorder %v328, 0
        %v339 = vand.u32 %v328, 2139095040
        %v340 = vshrl.u32 %v339, 23
        %v341 = vsub.s32 %v340, 127
        %v342 = vand.u32 2147483647, %v328
        %v343 = vand.u32 %v342, 8388607
        %v344 = vor.u32 %v343, 8388608
        %v345 = vsub.s32 0, %v344
        %v346 = vadd.s32 %v341, 1
        %vm347 = vcmp.gt.s32.totalorder %v346, 0
        %v348 = vsel %vm347, %v346, 0
        %v349 = vshrl.u32 %v348, 5
        %v350 = vand.u32 %v348, 31
        %v351 = vsub.s32 32, %v350
        %v352 = vshrl.u32 683565275, %v351
        %v353 = vshll.u32 683565275, %v350
        %v354 = vshrl.u32 2475754826, %v351
        %v355 = vor.u32 %v353, %v354
        %v356 = vshll.u32 2475754826, %v350
        %v357 = vshrl.u32 2131351028, %v351
        %v358 = vor.u32 %v356, %v357
        %v359 = vshll.u32 2131351028, %v350
        %v360 = vshrl.u32 2102212464, %v351
        %v361 = vor.u32 %v359, %v360
        %v362 = vshll.u32 2102212464, %v350
        %v363 = vshrl.u32 920167782, %v351
        %v364 = vor.u32 %v362, %v363
        %v365 = vshll.u32 920167782, %v350
        %v366 = vshrl.u32 1326507024, %v351
        %v367 = vor.u32 %v365, %v366
        %vm368 = vcmp.lt.s32.totalorder %v349, 1
        %vm369 = vcmp.lt.s32.totalorder %v349, 2
        %vm370 = vcmp.lt.s32.totalorder %v349, 3
        %vm371 = vcmp.lt.s32.totalorder %v349, 4
        %v372 = vsel %vm368, %v352, %v355
        %v373 = vsel %vm371, %v361, 2102212464
        %v374 = vsel %vm370, %v358, %v373
        %v375 = vsel %vm369, %v372, %v374
        %v376 = vsel %vm368, %v355, %v358
        %v377 = vsel %vm371, %v364, 920167782
        %v378 = vsel %vm370, %v361, %v377
        %v379 = vsel %vm369, %v376, %v378
        %v380 = vsel %vm368, %v358, %v361
        %v381 = vsel %vm371, %v367, 1326507024
        %v382 = vsel %vm370, %v364, %v381
        %v383 = vsel %vm369, %v380, %v382
        %v384 = vshll.u32 %v344, 8
        %v385 = vmul.u32.u64.compose %v384, %v383
        %v386 = vextract.low.u32 %v385
        %v387 = vextract.high.u32 %v385
        %v388 = vmul.u32.u64.compose %v384, %v379
        %v389 = vextract.low.u32 %v388
        %v390 = vextract.high.u32 %v388
        %v391 = vmul.u32 %v384, %v375
        %v392 = vadd.s32 %v387, %v389
        %vm393 = vc.u32 %v387, %v389
        %v394 = vadd.s32 %v390, 1
        %v395 = vsel %vm393, %v394, %v390
        %v396 = vadd.s32 %v391, %v395
        %v397 = vadd.s32 %v396, 536870912
        %v398 = vshrl.u32 %v397, 30
        %v399 = vshll.u32 %v398, 30
        %v400 = vsub.s32 %v396, %v399
        %vm401 = vcmp.lt.s32.totalorder %v400, 0
        %v402 = vsub.s32 0, %v400
        %v403 = vsel %vm401, %v402, %v400
        %v404 = vclz %v403
        %v405 = vsub.s32 %v404, 2
        %vm406 = vcmp.gt.s32.totalorder 0, %v405
        %v407 = vsel %vm406, 0, %v405
        %v408 = vsub.s32 32, %v407
        %v409 = vshll.u32 %v400, %v407
        %v410 = vshrl.u32 %v392, %v408
        %v411 = vor.u32 %v409, %v410
        %v412 = vsub.s32 4294967266, %v407
        %v413 = vadd.s32 %v412, 127
        %v414 = vshll.u32 %v413, 23
        %v415 = vor.u32 4788187, %v414
        %v416 = vand.u32 2147483647, %v415
        %v418 = vcvt.s32.f32 %v411
        %v419 = vmul.f32 %v418, %v416
        %v420 = vxor.u32 %v419, 2147483648
        %v421 = vsel %vm338, %v420, %v419
        %v422 = vsub.s32 4, %v398
        %v423 = vsel %vm338, %v422, %v398
        %v424 = vsel %vm337, %v328, %v421
        %v425 = vsel %vm337, 0, %v423
        %v426 = vcosq.f32.pop %v424
        %v427 = vsinq.f32.pop %v424
        %vm428 = vweird.f32 %v328
        %v429 = vand.u32 %v425, 3
        %vm430 = vcmp.lt.s32.totalorder %v429, 2
        %vm431 = vcmp.eq.s32.totalorder %v429, 0
        %v432 = vxor.u32 %v427, 2147483648
        %v433 = vsel %vm431, %v426, %v432
        %vm434 = vcmp.eq.s32.totalorder %v429, 2
        %v435 = vxor.u32 %v426, 2147483648
        %v436 = vsel %vm434, %v435, %v427
        %v437 = vsel %vm430, %v433, %v436
        %v438 = vsel %vm428, nan, %v437
        %v439 = vand.u32 2147483647, %v329
        %vm440 = vcmp.le.f32.partialorder %v439, 0.7853982
        %vm441 = vcmp.lt.s32.totalorder %v329, 0
        %v442 = vand.u32 %v329, 2139095040
        %v443 = vshrl.u32 %v442, 23
        %v444 = vsub.s32 %v443, 127
        %v445 = vand.u32 2147483647, %v329
        %v446 = vand.u32 %v445, 8388607
        %v447 = vor.u32 %v446, 8388608
        %v448 = vsub.s32 0, %v447
        %v449 = vadd.s32 %v444, 1
        %vm450 = vcmp.gt.s32.totalorder %v449, 0
        %v451 = vsel %vm450, %v449, 0
        %v452 = vshrl.u32 %v451, 5
        %v453 = vand.u32 %v451, 31
        %v454 = vsub.s32 32, %v453
        %v455 = vshrl.u32 683565275, %v454
        %v456 = vshll.u32 683565275, %v453
        %v457 = vshrl.u32 2475754826, %v454
        %v458 = vor.u32 %v456, %v457
        %v459 = vshll.u32 2475754826, %v453
        %v460 = vshrl.u32 2131351028, %v454
        %v461 = vor.u32 %v459, %v460
        %v462 = vshll.u32 2131351028, %v453
        %v463 = vshrl.u32 2102212464, %v454
        %v464 = vor.u32 %v462, %v463
        %v465 = vshll.u32 2102212464, %v453
        %v466 = vshrl.u32 920167782, %v454
        %v467 = vor.u32 %v465, %v466
        %v468 = vshll.u32 920167782, %v453
        %v469 = vshrl.u32 1326507024, %v454
        %v470 = vor.u32 %v468, %v469
        %vm471 = vcmp.lt.s32.totalorder %v452, 1
        %vm472 = vcmp.lt.s32.totalorder %v452, 2
        %vm473 = vcmp.lt.s32.totalorder %v452, 3
        %vm474 = vcmp.lt.s32.totalorder %v452, 4
        %v475 = vsel %vm471, %v455, %v458
        %v476 = vsel %vm474, %v464, 2102212464
        %v477 = vsel %vm473, %v461, %v476
        %v478 = vsel %vm472, %v475, %v477
        %v479 = vsel %vm471, %v458, %v461
        %v480 = vsel %vm474, %v467, 920167782
        %v481 = vsel %vm473, %v464, %v480
        %v482 = vsel %vm472, %v479, %v481
        %v483 = vsel %vm471, %v461, %v464
        %v484 = vsel %vm474, %v470, 1326507024
        %v485 = vsel %vm473, %v467, %v484
        %v486 = vsel %vm472, %v483, %v485
        %v487 = vshll.u32 %v447, 8
        %v488 = vmul.u32.u64.compose %v487, %v486
        %v489 = vextract.low.u32 %v488
        %v490 = vextract.high.u32 %v488
        %v491 = vmul.u32.u64.compose %v487, %v482
        %v492 = vextract.low.u32 %v491
        %v493 = vextract.high.u32 %v491
        %v494 = vmul.u32 %v487, %v478
        %v495 = vadd.s32 %v490, %v492
        %vm496 = vc.u32 %v490, %v492
        %v497 = vadd.s32 %v493, 1
        %v498 = vsel %vm496, %v497, %v493
        %v499 = vadd.s32 %v494, %v498
        %v500 = vadd.s32 %v499, 536870912
        %v501 = vshrl.u32 %v500, 30
        %v502 = vshll.u32 %v501, 30
        %v503 = vsub.s32 %v499, %v502
        %vm504 = vcmp.lt.s32.totalorder %v503, 0
        %v505 = vsub.s32 0, %v503
        %v506 = vsel %vm504, %v505, %v503
        %v507 = vclz %v506
        %v508 = vsub.s32 %v507, 2
        %vm509 = vcmp.gt.s32.totalorder 0, %v508
        %v510 = vsel %vm509, 0, %v508
        %v511 = vsub.s32 32, %v510
        %v512 = vshll.u32 %v503, %v510
        %v513 = vshrl.u32 %v495, %v511
        %v514 = vor.u32 %v512, %v513
        %v515 = vsub.s32 4294967266, %v510
        %v516 = vadd.s32 %v515, 127
        %v517 = vshll.u32 %v516, 23
        %v518 = vor.u32 4788187, %v517
        %v519 = vand.u32 2147483647, %v518
        %v521 = vcvt.s32.f32 %v514
        %v522 = vmul.f32 %v521, %v519
        %v523 = vxor.u32 %v522, 2147483648
        %v524 = vsel %vm441, %v523, %v522
        %v525 = vsub.s32 4, %v501
        %v526 = vsel %vm441, %v525, %v501
        %v527 = vsel %vm440, %v329, %v524
        %v528 = vsel %vm440, 0, %v526
        %v529 = vcosq.f32.pop %v527
        %v530 = vsinq.f32.pop %v527
        %vm531 = vweird.f32 %v329
        %v532 = vand.u32 %v528, 3
        %vm533 = vcmp.lt.s32.totalorder %v532, 2
        %vm534 = vcmp.eq.s32.totalorder %v532, 0
        %v535 = vxor.u32 %v530, 2147483648
        %v536 = vsel %vm534, %v529, %v535
        %vm537 = vcmp.eq.s32.totalorder %v532, 2
        %v538 = vxor.u32 %v529, 2147483648
        %v539 = vsel %vm537, %v538, %v530
        %v540 = vsel %vm533, %v536, %v539
        %v541 = vsel %vm531, nan, %v540
        %v542 = vand.u32 2147483647, %v330
        %vm543 = vcmp.le.f32.partialorder %v542, 0.7853982
        %vm544 = vcmp.lt.s32.totalorder %v330, 0
        %v545 = vand.u32 %v330, 2139095040
        %v546 = vshrl.u32 %v545, 23
        %v547 = vsub.s32 %v546, 127
        %v548 = vand.u32 2147483647, %v330
        %v549 = vand.u32 %v548, 8388607
        %v550 = vor.u32 %v549, 8388608
        %v551 = vsub.s32 0, %v550
        %v552 = vadd.s32 %v547, 1
        %vm553 = vcmp.gt.s32.totalorder %v552, 0
        %v554 = vsel %vm553, %v552, 0
        %v555 = vshrl.u32 %v554, 5
        %v556 = vand.u32 %v554, 31
        %v557 = vsub.s32 32, %v556
        %v558 = vshrl.u32 683565275, %v557
        %v559 = vshll.u32 683565275, %v556
        %v560 = vshrl.u32 2475754826, %v557
        %v561 = vor.u32 %v559, %v560
        %v562 = vshll.u32 2475754826, %v556
        %v563 = vshrl.u32 2131351028, %v557
        %v564 = vor.u32 %v562, %v563
        %v565 = vshll.u32 2131351028, %v556
        %v566 = vshrl.u32 2102212464, %v557
        %v567 = vor.u32 %v565, %v566
        %v568 = vshll.u32 2102212464, %v556
        %v569 = vshrl.u32 920167782, %v557
        %v570 = vor.u32 %v568, %v569
        %v571 = vshll.u32 920167782, %v556
        %v572 = vshrl.u32 1326507024, %v557
        %v573 = vor.u32 %v571, %v572
        %vm574 = vcmp.lt.s32.totalorder %v555, 1
        %vm575 = vcmp.lt.s32.totalorder %v555, 2
        %vm576 = vcmp.lt.s32.totalorder %v555, 3
        %vm577 = vcmp.lt.s32.totalorder %v555, 4
        %v578 = vsel %vm574, %v558, %v561
        %v579 = vsel %vm577, %v567, 2102212464
        %v580 = vsel %vm576, %v564, %v579
        %v581 = vsel %vm575, %v578, %v580
        %v582 = vsel %vm574, %v561, %v564
        %v583 = vsel %vm577, %v570, 920167782
        %v584 = vsel %vm576, %v567, %v583
        %v585 = vsel %vm575, %v582, %v584
        %v586 = vsel %vm574, %v564, %v567
        %v587 = vsel %vm577, %v573, 1326507024
        %v588 = vsel %vm576, %v570, %v587
        %v589 = vsel %vm575, %v586, %v588
        %v590 = vshll.u32 %v550, 8
        %v591 = vmul.u32.u64.compose %v590, %v589
        %v592 = vextract.low.u32 %v591
        %v593 = vextract.high.u32 %v591
        %v594 = vmul.u32.u64.compose %v590, %v585
        %v595 = vextract.low.u32 %v594
        %v596 = vextract.high.u32 %v594
        %v597 = vmul.u32 %v590, %v581
        %v598 = vadd.s32 %v593, %v595
        %vm599 = vc.u32 %v593, %v595
        %v600 = vadd.s32 %v596, 1
        %v601 = vsel %vm599, %v600, %v596
        %v602 = vadd.s32 %v597, %v601
        %v603 = vadd.s32 %v602, 536870912
        %v604 = vshrl.u32 %v603, 30
        %v605 = vshll.u32 %v604, 30
        %v606 = vsub.s32 %v602, %v605
        %vm607 = vcmp.lt.s32.totalorder %v606, 0
        %v608 = vsub.s32 0, %v606
        %v609 = vsel %vm607, %v608, %v606
        %v610 = vclz %v609
        %v611 = vsub.s32 %v610, 2
        %vm612 = vcmp.gt.s32.totalorder 0, %v611
        %v613 = vsel %vm612, 0, %v611
        %v614 = vsub.s32 32, %v613
        %v615 = vshll.u32 %v606, %v613
        %v616 = vshrl.u32 %v598, %v614
        %v617 = vor.u32 %v615, %v616
        %v618 = vsub.s32 4294967266, %v613
        %v619 = vadd.s32 %v618, 127
        %v620 = vshll.u32 %v619, 23
        %v621 = vor.u32 4788187, %v620
        %v622 = vand.u32 2147483647, %v621
        %v624 = vcvt.s32.f32 %v617
        %v625 = vmul.f32 %v624, %v622
        %v626 = vxor.u32 %v625, 2147483648
        %v627 = vsel %vm544, %v626, %v625
        %v628 = vsub.s32 4, %v604
        %v629 = vsel %vm544, %v628, %v604
        %v630 = vsel %vm543, %v330, %v627
        %v631 = vsel %vm543, 0, %v629
        %v632 = vcosq.f32.pop %v630
        %v633 = vsinq.f32.pop %v630
        %vm634 = vweird.f32 %v330
        %v635 = vand.u32 %v631, 3
        %vm636 = vcmp.lt.s32.totalorder %v635, 2
        %vm637 = vcmp.eq.s32.totalorder %v635, 0
        %v638 = vxor.u32 %v633, 2147483648
        %v639 = vsel %vm637, %v632, %v638
        %vm640 = vcmp.eq.s32.totalorder %v635, 2
        %v641 = vxor.u32 %v632, 2147483648
        %v642 = vsel %vm640, %v641, %v633
        %v643 = vsel %vm636, %v639, %v642
        %v644 = vsel %vm634, nan, %v643
        %v645 = vand.u32 2147483647, %v331
        %vm646 = vcmp.le.f32.partialorder %v645, 0.7853982
        %vm647 = vcmp.lt.s32.totalorder %v331, 0
        %v648 = vand.u32 %v331, 2139095040
        %v649 = vshrl.u32 %v648, 23
        %v650 = vsub.s32 %v649, 127
        %v651 = vand.u32 2147483647, %v331
        %v652 = vand.u32 %v651, 8388607
        %v653 = vor.u32 %v652, 8388608
        %v654 = vsub.s32 0, %v653
        %v655 = vadd.s32 %v650, 1
        %vm656 = vcmp.gt.s32.totalorder %v655, 0
        %v657 = vsel %vm656, %v655, 0
        %v658 = vshrl.u32 %v657, 5
        %v659 = vand.u32 %v657, 31
        %v660 = vsub.s32 32, %v659
        %v661 = vshrl.u32 683565275, %v660
        %v662 = vshll.u32 683565275, %v659
        %v663 = vshrl.u32 2475754826, %v660
        %v664 = vor.u32 %v662, %v663
        %v665 = vshll.u32 2475754826, %v659
        %v666 = vshrl.u32 2131351028, %v660
        %v667 = vor.u32 %v665, %v666
        %v668 = vshll.u32 2131351028, %v659
        %v669 = vshrl.u32 2102212464, %v660
        %v670 = vor.u32 %v668, %v669
        %v671 = vshll.u32 2102212464, %v659
        %v672 = vshrl.u32 920167782, %v660
        %v673 = vor.u32 %v671, %v672
        %v674 = vshll.u32 920167782, %v659
        %v675 = vshrl.u32 1326507024, %v660
        %v676 = vor.u32 %v674, %v675
        %vm677 = vcmp.lt.s32.totalorder %v658, 1
        %vm678 = vcmp.lt.s32.totalorder %v658, 2
        %vm679 = vcmp.lt.s32.totalorder %v658, 3
        %vm680 = vcmp.lt.s32.totalorder %v658, 4
        %v681 = vsel %vm677, %v661, %v664
        %v682 = vsel %vm680, %v670, 2102212464
        %v683 = vsel %vm679, %v667, %v682
        %v684 = vsel %vm678, %v681, %v683
        %v685 = vsel %vm677, %v664, %v667
        %v686 = vsel %vm680, %v673, 920167782
        %v687 = vsel %vm679, %v670, %v686
        %v688 = vsel %vm678, %v685, %v687
        %v689 = vsel %vm677, %v667, %v670
        %v690 = vsel %vm680, %v676, 1326507024
        %v691 = vsel %vm679, %v673, %v690
        %v692 = vsel %vm678, %v689, %v691
        %v693 = vshll.u32 %v653, 8
        %v694 = vmul.u32.u64.compose %v693, %v692
        %v695 = vextract.low.u32 %v694
        %v696 = vextract.high.u32 %v694
        %v697 = vmul.u32.u64.compose %v693, %v688
        %v698 = vextract.low.u32 %v697
        %v699 = vextract.high.u32 %v697
        %v700 = vmul.u32 %v693, %v684
        %v701 = vadd.s32 %v696, %v698
        %vm702 = vc.u32 %v696, %v698
        %v703 = vadd.s32 %v699, 1
        %v704 = vsel %vm702, %v703, %v699
        %v705 = vadd.s32 %v700, %v704
        %v706 = vadd.s32 %v705, 536870912
        %v707 = vshrl.u32 %v706, 30
        %v708 = vshll.u32 %v707, 30
        %v709 = vsub.s32 %v705, %v708
        %vm710 = vcmp.lt.s32.totalorder %v709, 0
        %v711 = vsub.s32 0, %v709
        %v712 = vsel %vm710, %v711, %v709
        %v713 = vclz %v712
        %v714 = vsub.s32 %v713, 2
        %vm715 = vcmp.gt.s32.totalorder 0, %v714
        %v716 = vsel %vm715, 0, %v714
        %v717 = vsub.s32 32, %v716
        %v718 = vshll.u32 %v709, %v716
        %v719 = vshrl.u32 %v701, %v717
        %v720 = vor.u32 %v718, %v719
        %v721 = vsub.s32 4294967266, %v716
        %v722 = vadd.s32 %v721, 127
        %v723 = vshll.u32 %v722, 23
        %v724 = vor.u32 4788187, %v723
        %v725 = vand.u32 2147483647, %v724
        %v727 = vcvt.s32.f32 %v720
        %v728 = vmul.f32 %v727, %v725
        %v729 = vxor.u32 %v728, 2147483648
        %v730 = vsel %vm647, %v729, %v728
        %v731 = vsub.s32 4, %v707
        %v732 = vsel %vm647, %v731, %v707
        %v733 = vsel %vm646, %v331, %v730
        %v734 = vsel %vm646, 0, %v732
        %v735 = vcosq.f32.pop %v733
        %v736 = vsinq.f32.pop %v733
        %vm737 = vweird.f32 %v331
        %v738 = vand.u32 %v734, 3
        %vm739 = vcmp.lt.s32.totalorder %v738, 2
        %vm740 = vcmp.eq.s32.totalorder %v738, 0
        %v741 = vxor.u32 %v736, 2147483648
        %v742 = vsel %vm740, %v735, %v741
        %vm743 = vcmp.eq.s32.totalorder %v738, 2
        %v744 = vxor.u32 %v735, 2147483648
        %v745 = vsel %vm743, %v744, %v736
        %v746 = vsel %vm739, %v742, %v745
        %v747 = vsel %vm737, nan, %v746
        %v748 = vand.u32 2147483647, %v332
        %vm749 = vcmp.le.f32.partialorder %v748, 0.7853982
        %vm750 = vcmp.lt.s32.totalorder %v332, 0
        %v751 = vand.u32 %v332, 2139095040
        %v752 = vshrl.u32 %v751, 23
        %v753 = vsub.s32 %v752, 127
        %v754 = vand.u32 2147483647, %v332
        %v755 = vand.u32 %v754, 8388607
        %v756 = vor.u32 %v755, 8388608
        %v757 = vsub.s32 0, %v756
        %v758 = vadd.s32 %v753, 1
        %vm759 = vcmp.gt.s32.totalorder %v758, 0
        %v760 = vsel %vm759, %v758, 0
        %v761 = vshrl.u32 %v760, 5
        %v762 = vand.u32 %v760, 31
        %v763 = vsub.s32 32, %v762
        %v764 = vshrl.u32 683565275, %v763
        %v765 = vshll.u32 683565275, %v762
        %v766 = vshrl.u32 2475754826, %v763
        %v767 = vor.u32 %v765, %v766
        %v768 = vshll.u32 2475754826, %v762
        %v769 = vshrl.u32 2131351028, %v763
        %v770 = vor.u32 %v768, %v769
        %v771 = vshll.u32 2131351028, %v762
        %v772 = vshrl.u32 2102212464, %v763
        %v773 = vor.u32 %v771, %v772
        %v774 = vshll.u32 2102212464, %v762
        %v775 = vshrl.u32 920167782, %v763
        %v776 = vor.u32 %v774, %v775
        %v777 = vshll.u32 920167782, %v762
        %v778 = vshrl.u32 1326507024, %v763
        %v779 = vor.u32 %v777, %v778
        %vm780 = vcmp.lt.s32.totalorder %v761, 1
        %vm781 = vcmp.lt.s32.totalorder %v761, 2
        %vm782 = vcmp.lt.s32.totalorder %v761, 3
        %vm783 = vcmp.lt.s32.totalorder %v761, 4
        %v784 = vsel %vm780, %v764, %v767
        %v785 = vsel %vm783, %v773, 2102212464
        %v786 = vsel %vm782, %v770, %v785
        %v787 = vsel %vm781, %v784, %v786
        %v788 = vsel %vm780, %v767, %v770
        %v789 = vsel %vm783, %v776, 920167782
        %v790 = vsel %vm782, %v773, %v789
        %v791 = vsel %vm781, %v788, %v790
        %v792 = vsel %vm780, %v770, %v773
        %v793 = vsel %vm783, %v779, 1326507024
        %v794 = vsel %vm782, %v776, %v793
        %v795 = vsel %vm781, %v792, %v794
        %v796 = vshll.u32 %v756, 8
        %v797 = vmul.u32.u64.compose %v796, %v795
        %v798 = vextract.low.u32 %v797
        %v799 = vextract.high.u32 %v797
        %v800 = vmul.u32.u64.compose %v796, %v791
        %v801 = vextract.low.u32 %v800
        %v802 = vextract.high.u32 %v800
        %v803 = vmul.u32 %v796, %v787
        %v804 = vadd.s32 %v799, %v801
        %vm805 = vc.u32 %v799, %v801
        %v806 = vadd.s32 %v802, 1
        %v807 = vsel %vm805, %v806, %v802
        %v808 = vadd.s32 %v803, %v807
        %v809 = vadd.s32 %v808, 536870912
        %v810 = vshrl.u32 %v809, 30
        %v811 = vshll.u32 %v810, 30
        %v812 = vsub.s32 %v808, %v811
        %vm813 = vcmp.lt.s32.totalorder %v812, 0
        %v814 = vsub.s32 0, %v812
        %v815 = vsel %vm813, %v814, %v812
        %v816 = vclz %v815
        %v817 = vsub.s32 %v816, 2
        %vm818 = vcmp.gt.s32.totalorder 0, %v817
        %v819 = vsel %vm818, 0, %v817
        %v820 = vsub.s32 32, %v819
        %v821 = vshll.u32 %v812, %v819
        %v822 = vshrl.u32 %v804, %v820
        %v823 = vor.u32 %v821, %v822
        %v824 = vsub.s32 4294967266, %v819
        %v825 = vadd.s32 %v824, 127
        %v826 = vshll.u32 %v825, 23
        %v827 = vor.u32 4788187, %v826
        %v828 = vand.u32 2147483647, %v827
        %v830 = vcvt.s32.f32 %v823
        %v831 = vmul.f32 %v830, %v828
        %v832 = vxor.u32 %v831, 2147483648
        %v833 = vsel %vm750, %v832, %v831
        %v834 = vsub.s32 4, %v810
        %v835 = vsel %vm750, %v834, %v810
        %v836 = vsel %vm749, %v332, %v833
        %v837 = vsel %vm749, 0, %v835
        %v838 = vcosq.f32.pop %v836
        %v839 = vsinq.f32.pop %v836
        %vm840 = vweird.f32 %v332
        %v841 = vand.u32 %v837, 3
        %vm842 = vcmp.lt.s32.totalorder %v841, 2
        %vm843 = vcmp.eq.s32.totalorder %v841, 0
        %v844 = vxor.u32 %v839, 2147483648
        %v845 = vsel %vm843, %v838, %v844
        %vm846 = vcmp.eq.s32.totalorder %v841, 2
        %v847 = vxor.u32 %v838, 2147483648
        %v848 = vsel %vm846, %v847, %v839
        %v849 = vsel %vm842, %v845, %v848
        %v850 = vsel %vm840, nan, %v849
        %v851 = vand.u32 2147483647, %v333
        %vm852 = vcmp.le.f32.partialorder %v851, 0.7853982
        %vm853 = vcmp.lt.s32.totalorder %v333, 0
        %v854 = vand.u32 %v333, 2139095040
        %v855 = vshrl.u32 %v854, 23
        %v856 = vsub.s32 %v855, 127
        %v857 = vand.u32 2147483647, %v333
        %v858 = vand.u32 %v857, 8388607
        %v859 = vor.u32 %v858, 8388608
        %v860 = vsub.s32 0, %v859
        %v861 = vadd.s32 %v856, 1
        %vm862 = vcmp.gt.s32.totalorder %v861, 0
        %v863 = vsel %vm862, %v861, 0
        %v864 = vshrl.u32 %v863, 5
        %v865 = vand.u32 %v863, 31
        %v866 = vsub.s32 32, %v865
        %v867 = vshrl.u32 683565275, %v866
        %v868 = vshll.u32 683565275, %v865
        %v869 = vshrl.u32 2475754826, %v866
        %v870 = vor.u32 %v868, %v869
        %v871 = vshll.u32 2475754826, %v865
        %v872 = vshrl.u32 2131351028, %v866
        %v873 = vor.u32 %v871, %v872
        %v874 = vshll.u32 2131351028, %v865
        %v875 = vshrl.u32 2102212464, %v866
        %v876 = vor.u32 %v874, %v875
        %v877 = vshll.u32 2102212464, %v865
        %v878 = vshrl.u32 920167782, %v866
        %v879 = vor.u32 %v877, %v878
        %v880 = vshll.u32 920167782, %v865
        %v881 = vshrl.u32 1326507024, %v866
        %v882 = vor.u32 %v880, %v881
        %vm883 = vcmp.lt.s32.totalorder %v864, 1
        %vm884 = vcmp.lt.s32.totalorder %v864, 2
        %vm885 = vcmp.lt.s32.totalorder %v864, 3
        %vm886 = vcmp.lt.s32.totalorder %v864, 4
        %v887 = vsel %vm883, %v867, %v870
        %v888 = vsel %vm886, %v876, 2102212464
        %v889 = vsel %vm885, %v873, %v888
        %v890 = vsel %vm884, %v887, %v889
        %v891 = vsel %vm883, %v870, %v873
        %v892 = vsel %vm886, %v879, 920167782
        %v893 = vsel %vm885, %v876, %v892
        %v894 = vsel %vm884, %v891, %v893
        %v895 = vsel %vm883, %v873, %v876
        %v896 = vsel %vm886, %v882, 1326507024
        %v897 = vsel %vm885, %v879, %v896
        %v898 = vsel %vm884, %v895, %v897
        %v899 = vshll.u32 %v859, 8
        %v900 = vmul.u32.u64.compose %v899, %v898
        %v901 = vextract.low.u32 %v900
        %v902 = vextract.high.u32 %v900
        %v903 = vmul.u32.u64.compose %v899, %v894
        %v904 = vextract.low.u32 %v903
        %v905 = vextract.high.u32 %v903
        %v906 = vmul.u32 %v899, %v890
        %v907 = vadd.s32 %v902, %v904
        %vm908 = vc.u32 %v902, %v904
        %v909 = vadd.s32 %v905, 1
        %v910 = vsel %vm908, %v909, %v905
        %v911 = vadd.s32 %v906, %v910
        %v912 = vadd.s32 %v911, 536870912
        %v913 = vshrl.u32 %v912, 30
        %v914 = vshll.u32 %v913, 30
        %v915 = vsub.s32 %v911, %v914
        %vm916 = vcmp.lt.s32.totalorder %v915, 0
        %v917 = vsub.s32 0, %v915
        %v918 = vsel %vm916, %v917, %v915
        %v919 = vclz %v918
        %v920 = vsub.s32 %v919, 2
        %vm921 = vcmp.gt.s32.totalorder 0, %v920
        %v922 = vsel %vm921, 0, %v920
        %v923 = vsub.s32 32, %v922
        %v924 = vshll.u32 %v915, %v922
        %v925 = vshrl.u32 %v907, %v923
        %v926 = vor.u32 %v924, %v925
        %v927 = vsub.s32 4294967266, %v922
        %v928 = vadd.s32 %v927, 127
        %v929 = vshll.u32 %v928, 23
        %v930 = vor.u32 4788187, %v929
        %v931 = vand.u32 2147483647, %v930
        %v933 = vcvt.s32.f32 %v926
        %v934 = vmul.f32 %v933, %v931
        %v935 = vxor.u32 %v934, 2147483648
        %v936 = vsel %vm853, %v935, %v934
        %v937 = vsub.s32 4, %v913
        %v938 = vsel %vm853, %v937, %v913
        %v939 = vsel %vm852, %v333, %v936
        %v940 = vsel %vm852, 0, %v938
        %v941 = vcosq.f32.pop %v939
        %v942 = vsinq.f32.pop %v939
        %vm943 = vweird.f32 %v333
        %v944 = vand.u32 %v940, 3
        %vm945 = vcmp.lt.s32.totalorder %v944, 2
        %vm946 = vcmp.eq.s32.totalorder %v944, 0
        %v947 = vxor.u32 %v942, 2147483648
        %v948 = vsel %vm946, %v941, %v947
        %vm949 = vcmp.eq.s32.totalorder %v944, 2
        %v950 = vxor.u32 %v941, 2147483648
        %v951 = vsel %vm949, %v950, %v942
        %v952 = vsel %vm945, %v948, %v951
        %v953 = vsel %vm943, nan, %v952
        %v954 = vand.u32 2147483647, %v334
        %vm955 = vcmp.le.f32.partialorder %v954, 0.7853982
        %vm956 = vcmp.lt.s32.totalorder %v334, 0
        %v957 = vand.u32 %v334, 2139095040
        %v958 = vshrl.u32 %v957, 23
        %v959 = vsub.s32 %v958, 127
        %v960 = vand.u32 2147483647, %v334
        %v961 = vand.u32 %v960, 8388607
        %v962 = vor.u32 %v961, 8388608
        %v963 = vsub.s32 0, %v962
        %v964 = vadd.s32 %v959, 1
        %vm965 = vcmp.gt.s32.totalorder %v964, 0
        %v966 = vsel %vm965, %v964, 0
        %v967 = vshrl.u32 %v966, 5
        %v968 = vand.u32 %v966, 31
        %v969 = vsub.s32 32, %v968
        %v970 = vshrl.u32 683565275, %v969
        %v971 = vshll.u32 683565275, %v968
        %v972 = vshrl.u32 2475754826, %v969
        %v973 = vor.u32 %v971, %v972
        %v974 = vshll.u32 2475754826, %v968
        %v975 = vshrl.u32 2131351028, %v969
        %v976 = vor.u32 %v974, %v975
        %v977 = vshll.u32 2131351028, %v968
        %v978 = vshrl.u32 2102212464, %v969
        %v979 = vor.u32 %v977, %v978
        %v980 = vshll.u32 2102212464, %v968
        %v981 = vshrl.u32 920167782, %v969
        %v982 = vor.u32 %v980, %v981
        %v983 = vshll.u32 920167782, %v968
        %v984 = vshrl.u32 1326507024, %v969
        %v985 = vor.u32 %v983, %v984
        %vm986 = vcmp.lt.s32.totalorder %v967, 1
        %vm987 = vcmp.lt.s32.totalorder %v967, 2
        %vm988 = vcmp.lt.s32.totalorder %v967, 3
        %vm989 = vcmp.lt.s32.totalorder %v967, 4
        %v990 = vsel %vm986, %v970, %v973
        %v991 = vsel %vm989, %v979, 2102212464
        %v992 = vsel %vm988, %v976, %v991
        %v993 = vsel %vm987, %v990, %v992
        %v994 = vsel %vm986, %v973, %v976
        %v995 = vsel %vm989, %v982, 920167782
        %v996 = vsel %vm988, %v979, %v995
        %v997 = vsel %vm987, %v994, %v996
        %v998 = vsel %vm986, %v976, %v979
        %v999 = vsel %vm989, %v985, 1326507024
        %v1000 = vsel %vm988, %v982, %v999
        %v1001 = vsel %vm987, %v998, %v1000
        %v1002 = vshll.u32 %v962, 8
        %v1003 = vmul.u32.u64.compose %v1002, %v1001
        %v1004 = vextract.low.u32 %v1003
        %v1005 = vextract.high.u32 %v1003
        %v1006 = vmul.u32.u64.compose %v1002, %v997
        %v1007 = vextract.low.u32 %v1006
        %v1008 = vextract.high.u32 %v1006
        %v1009 = vmul.u32 %v1002, %v993
        %v1010 = vadd.s32 %v1005, %v1007
        %vm1011 = vc.u32 %v1005, %v1007
        %v1012 = vadd.s32 %v1008, 1
        %v1013 = vsel %vm1011, %v1012, %v1008
        %v1014 = vadd.s32 %v1009, %v1013
        %v1015 = vadd.s32 %v1014, 536870912
        %v1016 = vshrl.u32 %v1015, 30
        %v1017 = vshll.u32 %v1016, 30
        %v1018 = vsub.s32 %v1014, %v1017
        %vm1019 = vcmp.lt.s32.totalorder %v1018, 0
        %v1020 = vsub.s32 0, %v1018
        %v1021 = vsel %vm1019, %v1020, %v1018
        %v1022 = vclz %v1021
        %v1023 = vsub.s32 %v1022, 2
        %vm1024 = vcmp.gt.s32.totalorder 0, %v1023
        %v1025 = vsel %vm1024, 0, %v1023
        %v1026 = vsub.s32 32, %v1025
        %v1027 = vshll.u32 %v1018, %v1025
        %v1028 = vshrl.u32 %v1010, %v1026
        %v1029 = vor.u32 %v1027, %v1028
        %v1030 = vsub.s32 4294967266, %v1025
        %v1031 = vadd.s32 %v1030, 127
        %v1032 = vshll.u32 %v1031, 23
        %v1033 = vor.u32 4788187, %v1032
        %v1034 = vand.u32 2147483647, %v1033
        %v1036 = vcvt.s32.f32 %v1029
        %v1037 = vmul.f32 %v1036, %v1034
        %v1038 = vxor.u32 %v1037, 2147483648
        %v1039 = vsel %vm956, %v1038, %v1037
        %v1040 = vsub.s32 4, %v1016
        %v1041 = vsel %vm956, %v1040, %v1016
        %v1042 = vsel %vm955, %v334, %v1039
        %v1043 = vsel %vm955, 0, %v1041
        %v1044 = vcosq.f32.pop %v1042
        %v1045 = vsinq.f32.pop %v1042
        %vm1046 = vweird.f32 %v334
        %v1047 = vand.u32 %v1043, 3
        %vm1048 = vcmp.lt.s32.totalorder %v1047, 2
        %vm1049 = vcmp.eq.s32.totalorder %v1047, 0
        %v1050 = vxor.u32 %v1045, 2147483648
        %v1051 = vsel %vm1049, %v1044, %v1050
        %vm1052 = vcmp.eq.s32.totalorder %v1047, 2
        %v1053 = vxor.u32 %v1044, 2147483648
        %v1054 = vsel %vm1052, %v1053, %v1045
        %v1055 = vsel %vm1048, %v1051, %v1054
        %v1056 = vsel %vm1046, nan, %v1055
        %v1057 = vand.u32 2147483647, %v335
        %vm1058 = vcmp.le.f32.partialorder %v1057, 0.7853982
        %vm1059 = vcmp.lt.s32.totalorder %v335, 0
        %v1060 = vand.u32 %v335, 2139095040
        %v1061 = vshrl.u32 %v1060, 23
        %v1062 = vsub.s32 %v1061, 127
        %v1063 = vand.u32 2147483647, %v335
        %v1064 = vand.u32 %v1063, 8388607
        %v1065 = vor.u32 %v1064, 8388608
        %v1066 = vsub.s32 0, %v1065
        %v1067 = vadd.s32 %v1062, 1
        %vm1068 = vcmp.gt.s32.totalorder %v1067, 0
        %v1069 = vsel %vm1068, %v1067, 0
        %v1070 = vshrl.u32 %v1069, 5
        %v1071 = vand.u32 %v1069, 31
        %v1072 = vsub.s32 32, %v1071
        %v1073 = vshrl.u32 683565275, %v1072
        %v1074 = vshll.u32 683565275, %v1071
        %v1075 = vshrl.u32 2475754826, %v1072
        %v1076 = vor.u32 %v1074, %v1075
        %v1077 = vshll.u32 2475754826, %v1071
        %v1078 = vshrl.u32 2131351028, %v1072
        %v1079 = vor.u32 %v1077, %v1078
        %v1080 = vshll.u32 2131351028, %v1071
        %v1081 = vshrl.u32 2102212464, %v1072
        %v1082 = vor.u32 %v1080, %v1081
        %v1083 = vshll.u32 2102212464, %v1071
        %v1084 = vshrl.u32 920167782, %v1072
        %v1085 = vor.u32 %v1083, %v1084
        %v1086 = vshll.u32 920167782, %v1071
        %v1087 = vshrl.u32 1326507024, %v1072
        %v1088 = vor.u32 %v1086, %v1087
        %vm1089 = vcmp.lt.s32.totalorder %v1070, 1
        %vm1090 = vcmp.lt.s32.totalorder %v1070, 2
        %vm1091 = vcmp.lt.s32.totalorder %v1070, 3
        %vm1092 = vcmp.lt.s32.totalorder %v1070, 4
        %v1093 = vsel %vm1089, %v1073, %v1076
        %v1094 = vsel %vm1092, %v1082, 2102212464
        %v1095 = vsel %vm1091, %v1079, %v1094
        %v1096 = vsel %vm1090, %v1093, %v1095
        %v1097 = vsel %vm1089, %v1076, %v1079
        %v1098 = vsel %vm1092, %v1085, 920167782
        %v1099 = vsel %vm1091, %v1082, %v1098
        %v1100 = vsel %vm1090, %v1097, %v1099
        %v1101 = vsel %vm1089, %v1079, %v1082
        %v1102 = vsel %vm1092, %v1088, 1326507024
        %v1103 = vsel %vm1091, %v1085, %v1102
        %v1104 = vsel %vm1090, %v1101, %v1103
        %v1105 = vshll.u32 %v1065, 8
        %v1106 = vmul.u32.u64.compose %v1105, %v1104
        %v1107 = vextract.low.u32 %v1106
        %v1108 = vextract.high.u32 %v1106
        %v1109 = vmul.u32.u64.compose %v1105, %v1100
        %v1110 = vextract.low.u32 %v1109
        %v1111 = vextract.high.u32 %v1109
        %v1112 = vmul.u32 %v1105, %v1096
        %v1113 = vadd.s32 %v1108, %v1110
        %vm1114 = vc.u32 %v1108, %v1110
        %v1115 = vadd.s32 %v1111, 1
        %v1116 = vsel %vm1114, %v1115, %v1111
        %v1117 = vadd.s32 %v1112, %v1116
        %v1118 = vadd.s32 %v1117, 536870912
        %v1119 = vshrl.u32 %v1118, 30
        %v1120 = vshll.u32 %v1119, 30
        %v1121 = vsub.s32 %v1117, %v1120
        %vm1122 = vcmp.lt.s32.totalorder %v1121, 0
        %v1123 = vsub.s32 0, %v1121
        %v1124 = vsel %vm1122, %v1123, %v1121
        %v1125 = vclz %v1124
        %v1126 = vsub.s32 %v1125, 2
        %vm1127 = vcmp.gt.s32.totalorder 0, %v1126
        %v1128 = vsel %vm1127, 0, %v1126
        %v1129 = vsub.s32 32, %v1128
        %v1130 = vshll.u32 %v1121, %v1128
        %v1131 = vshrl.u32 %v1113, %v1129
        %v1132 = vor.u32 %v1130, %v1131
        %v1133 = vsub.s32 4294967266, %v1128
        %v1134 = vadd.s32 %v1133, 127
        %v1135 = vshll.u32 %v1134, 23
        %v1136 = vor.u32 4788187, %v1135
        %v1137 = vand.u32 2147483647, %v1136
        %v1139 = vcvt.s32.f32 %v1132
        %v1140 = vmul.f32 %v1139, %v1137
        %v1141 = vxor.u32 %v1140, 2147483648
        %v1142 = vsel %vm1059, %v1141, %v1140
        %v1143 = vsub.s32 4, %v1119
        %v1144 = vsel %vm1059, %v1143, %v1119
        %v1145 = vsel %vm1058, %v335, %v1142
        %v1146 = vsel %vm1058, 0, %v1144
        %v1147 = vcosq.f32.pop %v1145
        %v1148 = vsinq.f32.pop %v1145
        %vm1149 = vweird.f32 %v335
        %v1150 = vand.u32 %v1146, 3
        %vm1151 = vcmp.lt.s32.totalorder %v1150, 2
        %vm1152 = vcmp.eq.s32.totalorder %v1150, 0
        %v1153 = vxor.u32 %v1148, 2147483648
        %v1154 = vsel %vm1152, %v1147, %v1153
        %vm1155 = vcmp.eq.s32.totalorder %v1150, 2
        %v1156 = vxor.u32 %v1147, 2147483648
        %v1157 = vsel %vm1155, %v1156, %v1148
        %v1158 = vsel %vm1151, %v1154, %v1157
        %v1159 = vsel %vm1149, nan, %v1158
        %v1160 = vand.u32 2147483647, %v328
        %vm1161 = vcmp.le.f32.partialorder %v1160, 0.7853982
        %vm1162 = vcmp.lt.s32.totalorder %v328, 0
        %v1163 = vand.u32 %v328, 2139095040
        %v1164 = vshrl.u32 %v1163, 23
        %v1165 = vsub.s32 %v1164, 127
        %v1166 = vand.u32 2147483647, %v328
        %v1167 = vand.u32 %v1166, 8388607
        %v1168 = vor.u32 %v1167, 8388608
        %v1169 = vsub.s32 0, %v1168
        %v1170 = vadd.s32 %v1165, 1
        %vm1171 = vcmp.gt.s32.totalorder %v1170, 0
        %v1172 = vsel %vm1171, %v1170, 0
        %v1173 = vshrl.u32 %v1172, 5
        %v1174 = vand.u32 %v1172, 31
        %v1175 = vsub.s32 32, %v1174
        %v1176 = vshrl.u32 683565275, %v1175
        %v1177 = vshll.u32 683565275, %v1174
        %v1178 = vshrl.u32 2475754826, %v1175
        %v1179 = vor.u32 %v1177, %v1178
        %v1180 = vshll.u32 2475754826, %v1174
        %v1181 = vshrl.u32 2131351028, %v1175
        %v1182 = vor.u32 %v1180, %v1181
        %v1183 = vshll.u32 2131351028, %v1174
        %v1184 = vshrl.u32 2102212464, %v1175
        %v1185 = vor.u32 %v1183, %v1184
        %v1186 = vshll.u32 2102212464, %v1174
        %v1187 = vshrl.u32 920167782, %v1175
        %v1188 = vor.u32 %v1186, %v1187
        %v1189 = vshll.u32 920167782, %v1174
        %v1190 = vshrl.u32 1326507024, %v1175
        %v1191 = vor.u32 %v1189, %v1190
        %vm1192 = vcmp.lt.s32.totalorder %v1173, 1
        %vm1193 = vcmp.lt.s32.totalorder %v1173, 2
        %vm1194 = vcmp.lt.s32.totalorder %v1173, 3
        %vm1195 = vcmp.lt.s32.totalorder %v1173, 4
        %v1196 = vsel %vm1192, %v1176, %v1179
        %v1197 = vsel %vm1195, %v1185, 2102212464
        %v1198 = vsel %vm1194, %v1182, %v1197
        %v1199 = vsel %vm1193, %v1196, %v1198
        %v1200 = vsel %vm1192, %v1179, %v1182
        %v1201 = vsel %vm1195, %v1188, 920167782
        %v1202 = vsel %vm1194, %v1185, %v1201
        %v1203 = vsel %vm1193, %v1200, %v1202
        %v1204 = vsel %vm1192, %v1182, %v1185
        %v1205 = vsel %vm1195, %v1191, 1326507024
        %v1206 = vsel %vm1194, %v1188, %v1205
        %v1207 = vsel %vm1193, %v1204, %v1206
        %v1208 = vshll.u32 %v1168, 8
        %v1209 = vmul.u32.u64.compose %v1208, %v1207
        %v1210 = vextract.low.u32 %v1209
        %v1211 = vextract.high.u32 %v1209
        %v1212 = vmul.u32.u64.compose %v1208, %v1203
        %v1213 = vextract.low.u32 %v1212
        %v1214 = vextract.high.u32 %v1212
        %v1215 = vmul.u32 %v1208, %v1199
        %v1216 = vadd.s32 %v1211, %v1213
        %vm1217 = vc.u32 %v1211, %v1213
        %v1218 = vadd.s32 %v1214, 1
        %v1219 = vsel %vm1217, %v1218, %v1214
        %v1220 = vadd.s32 %v1215, %v1219
        %v1221 = vadd.s32 %v1220, 536870912
        %v1222 = vshrl.u32 %v1221, 30
        %v1223 = vshll.u32 %v1222, 30
        %v1224 = vsub.s32 %v1220, %v1223
        %vm1225 = vcmp.lt.s32.totalorder %v1224, 0
        %v1226 = vsub.s32 0, %v1224
        %v1227 = vsel %vm1225, %v1226, %v1224
        %v1228 = vclz %v1227
        %v1229 = vsub.s32 %v1228, 2
        %vm1230 = vcmp.gt.s32.totalorder 0, %v1229
        %v1231 = vsel %vm1230, 0, %v1229
        %v1232 = vsub.s32 32, %v1231
        %v1233 = vshll.u32 %v1224, %v1231
        %v1234 = vshrl.u32 %v1216, %v1232
        %v1235 = vor.u32 %v1233, %v1234
        %v1236 = vsub.s32 4294967266, %v1231
        %v1237 = vadd.s32 %v1236, 127
        %v1238 = vshll.u32 %v1237, 23
        %v1239 = vor.u32 4788187, %v1238
        %v1240 = vand.u32 2147483647, %v1239
        %v1242 = vcvt.s32.f32 %v1235
        %v1243 = vmul.f32 %v1242, %v1240
        %v1244 = vxor.u32 %v1243, 2147483648
        %v1245 = vsel %vm1162, %v1244, %v1243
        %v1246 = vsub.s32 4, %v1222
        %v1247 = vsel %vm1162, %v1246, %v1222
        %v1248 = vsel %vm1161, %v328, %v1245
        %v1249 = vsel %vm1161, 0, %v1247
        %v1250 = vcosq.f32.pop %v1248
        %v1251 = vsinq.f32.pop %v1248
        %vm1252 = vweird.f32 %v328
        %v1253 = vadd.s32 %v1249, 3
        %v1254 = vand.u32 %v1253, 3
        %vm1255 = vcmp.lt.s32.totalorder %v1254, 2
        %vm1256 = vcmp.eq.s32.totalorder %v1254, 0
        %v1257 = vxor.u32 %v1251, 2147483648
        %v1258 = vsel %vm1256, %v1250, %v1257
        %vm1259 = vcmp.eq.s32.totalorder %v1254, 2
        %v1260 = vxor.u32 %v1250, 2147483648
        %v1261 = vsel %vm1259, %v1260, %v1251
        %v1262 = vsel %vm1255, %v1258, %v1261
        %v1263 = vsel %vm1252, nan, %v1262
        %v1264 = vand.u32 2147483647, %v329
        %vm1265 = vcmp.le.f32.partialorder %v1264, 0.7853982
        %vm1266 = vcmp.lt.s32.totalorder %v329, 0
        %v1267 = vand.u32 %v329, 2139095040
        %v1268 = vshrl.u32 %v1267, 23
        %v1269 = vsub.s32 %v1268, 127
        %v1270 = vand.u32 2147483647, %v329
        %v1271 = vand.u32 %v1270, 8388607
        %v1272 = vor.u32 %v1271, 8388608
        %v1273 = vsub.s32 0, %v1272
        %v1274 = vadd.s32 %v1269, 1
        %vm1275 = vcmp.gt.s32.totalorder %v1274, 0
        %v1276 = vsel %vm1275, %v1274, 0
        %v1277 = vshrl.u32 %v1276, 5
        %v1278 = vand.u32 %v1276, 31
        %v1279 = vsub.s32 32, %v1278
        %v1280 = vshrl.u32 683565275, %v1279
        %v1281 = vshll.u32 683565275, %v1278
        %v1282 = vshrl.u32 2475754826, %v1279
        %v1283 = vor.u32 %v1281, %v1282
        %v1284 = vshll.u32 2475754826, %v1278
        %v1285 = vshrl.u32 2131351028, %v1279
        %v1286 = vor.u32 %v1284, %v1285
        %v1287 = vshll.u32 2131351028, %v1278
        %v1288 = vshrl.u32 2102212464, %v1279
        %v1289 = vor.u32 %v1287, %v1288
        %v1290 = vshll.u32 2102212464, %v1278
        %v1291 = vshrl.u32 920167782, %v1279
        %v1292 = vor.u32 %v1290, %v1291
        %v1293 = vshll.u32 920167782, %v1278
        %v1294 = vshrl.u32 1326507024, %v1279
        %v1295 = vor.u32 %v1293, %v1294
        %vm1296 = vcmp.lt.s32.totalorder %v1277, 1
        %vm1297 = vcmp.lt.s32.totalorder %v1277, 2
        %vm1298 = vcmp.lt.s32.totalorder %v1277, 3
        %vm1299 = vcmp.lt.s32.totalorder %v1277, 4
        %v1300 = vsel %vm1296, %v1280, %v1283
        %v1301 = vsel %vm1299, %v1289, 2102212464
        %v1302 = vsel %vm1298, %v1286, %v1301
        %v1303 = vsel %vm1297, %v1300, %v1302
        %v1304 = vsel %vm1296, %v1283, %v1286
        %v1305 = vsel %vm1299, %v1292, 920167782
        %v1306 = vsel %vm1298, %v1289, %v1305
        %v1307 = vsel %vm1297, %v1304, %v1306
        %v1308 = vsel %vm1296, %v1286, %v1289
        %v1309 = vsel %vm1299, %v1295, 1326507024
        %v1310 = vsel %vm1298, %v1292, %v1309
        %v1311 = vsel %vm1297, %v1308, %v1310
        %v1312 = vshll.u32 %v1272, 8
        %v1313 = vmul.u32.u64.compose %v1312, %v1311
        %v1314 = vextract.low.u32 %v1313
        %v1315 = vextract.high.u32 %v1313
        %v1316 = vmul.u32.u64.compose %v1312, %v1307
        %v1317 = vextract.low.u32 %v1316
        %v1318 = vextract.high.u32 %v1316
        %v1319 = vmul.u32 %v1312, %v1303
        %v1320 = vadd.s32 %v1315, %v1317
        %vm1321 = vc.u32 %v1315, %v1317
        %v1322 = vadd.s32 %v1318, 1
        %v1323 = vsel %vm1321, %v1322, %v1318
        %v1324 = vadd.s32 %v1319, %v1323
        %v1325 = vadd.s32 %v1324, 536870912
        %v1326 = vshrl.u32 %v1325, 30
        %v1327 = vshll.u32 %v1326, 30
        %v1328 = vsub.s32 %v1324, %v1327
        %vm1329 = vcmp.lt.s32.totalorder %v1328, 0
        %v1330 = vsub.s32 0, %v1328
        %v1331 = vsel %vm1329, %v1330, %v1328
        %v1332 = vclz %v1331
        %v1333 = vsub.s32 %v1332, 2
        %vm1334 = vcmp.gt.s32.totalorder 0, %v1333
        %v1335 = vsel %vm1334, 0, %v1333
        %v1336 = vsub.s32 32, %v1335
        %v1337 = vshll.u32 %v1328, %v1335
        %v1338 = vshrl.u32 %v1320, %v1336
        %v1339 = vor.u32 %v1337, %v1338
        %v1340 = vsub.s32 4294967266, %v1335
        %v1341 = vadd.s32 %v1340, 127
        %v1342 = vshll.u32 %v1341, 23
        %v1343 = vor.u32 4788187, %v1342
        %v1344 = vand.u32 2147483647, %v1343
        %v1346 = vcvt.s32.f32 %v1339
        %v1347 = vmul.f32 %v1346, %v1344
        %v1348 = vxor.u32 %v1347, 2147483648
        %v1349 = vsel %vm1266, %v1348, %v1347
        %v1350 = vsub.s32 4, %v1326
        %v1351 = vsel %vm1266, %v1350, %v1326
        %v1352 = vsel %vm1265, %v329, %v1349
        %v1353 = vsel %vm1265, 0, %v1351
        %v1354 = vcosq.f32.pop %v1352
        %v1355 = vsinq.f32.pop %v1352
        %vm1356 = vweird.f32 %v329
        %v1357 = vadd.s32 %v1353, 3
        %v1358 = vand.u32 %v1357, 3
        %vm1359 = vcmp.lt.s32.totalorder %v1358, 2
        %vm1360 = vcmp.eq.s32.totalorder %v1358, 0
        %v1361 = vxor.u32 %v1355, 2147483648
        %v1362 = vsel %vm1360, %v1354, %v1361
        %vm1363 = vcmp.eq.s32.totalorder %v1358, 2
        %v1364 = vxor.u32 %v1354, 2147483648
        %v1365 = vsel %vm1363, %v1364, %v1355
        %v1366 = vsel %vm1359, %v1362, %v1365
        %v1367 = vsel %vm1356, nan, %v1366
        %v1368 = vand.u32 2147483647, %v330
        %vm1369 = vcmp.le.f32.partialorder %v1368, 0.7853982
        %vm1370 = vcmp.lt.s32.totalorder %v330, 0
        %v1371 = vand.u32 %v330, 2139095040
        %v1372 = vshrl.u32 %v1371, 23
        %v1373 = vsub.s32 %v1372, 127
        %v1374 = vand.u32 2147483647, %v330
        %v1375 = vand.u32 %v1374, 8388607
        %v1376 = vor.u32 %v1375, 8388608
        %v1377 = vsub.s32 0, %v1376
        %v1378 = vadd.s32 %v1373, 1
        %vm1379 = vcmp.gt.s32.totalorder %v1378, 0
        %v1380 = vsel %vm1379, %v1378, 0
        %v1381 = vshrl.u32 %v1380, 5
        %v1382 = vand.u32 %v1380, 31
        %v1383 = vsub.s32 32, %v1382
        %v1384 = vshrl.u32 683565275, %v1383
        %v1385 = vshll.u32 683565275, %v1382
        %v1386 = vshrl.u32 2475754826, %v1383
        %v1387 = vor.u32 %v1385, %v1386
        %v1388 = vshll.u32 2475754826, %v1382
        %v1389 = vshrl.u32 2131351028, %v1383
        %v1390 = vor.u32 %v1388, %v1389
        %v1391 = vshll.u32 2131351028, %v1382
        %v1392 = vshrl.u32 2102212464, %v1383
        %v1393 = vor.u32 %v1391, %v1392
        %v1394 = vshll.u32 2102212464, %v1382
        %v1395 = vshrl.u32 920167782, %v1383
        %v1396 = vor.u32 %v1394, %v1395
        %v1397 = vshll.u32 920167782, %v1382
        %v1398 = vshrl.u32 1326507024, %v1383
        %v1399 = vor.u32 %v1397, %v1398
        %vm1400 = vcmp.lt.s32.totalorder %v1381, 1
        %vm1401 = vcmp.lt.s32.totalorder %v1381, 2
        %vm1402 = vcmp.lt.s32.totalorder %v1381, 3
        %vm1403 = vcmp.lt.s32.totalorder %v1381, 4
        %v1404 = vsel %vm1400, %v1384, %v1387
        %v1405 = vsel %vm1403, %v1393, 2102212464
        %v1406 = vsel %vm1402, %v1390, %v1405
        %v1407 = vsel %vm1401, %v1404, %v1406
        %v1408 = vsel %vm1400, %v1387, %v1390
        %v1409 = vsel %vm1403, %v1396, 920167782
        %v1410 = vsel %vm1402, %v1393, %v1409
        %v1411 = vsel %vm1401, %v1408, %v1410
        %v1412 = vsel %vm1400, %v1390, %v1393
        %v1413 = vsel %vm1403, %v1399, 1326507024
        %v1414 = vsel %vm1402, %v1396, %v1413
        %v1415 = vsel %vm1401, %v1412, %v1414
        %v1416 = vshll.u32 %v1376, 8
        %v1417 = vmul.u32.u64.compose %v1416, %v1415
        %v1418 = vextract.low.u32 %v1417
        %v1419 = vextract.high.u32 %v1417
        %v1420 = vmul.u32.u64.compose %v1416, %v1411
        %v1421 = vextract.low.u32 %v1420
        %v1422 = vextract.high.u32 %v1420
        %v1423 = vmul.u32 %v1416, %v1407
        %v1424 = vadd.s32 %v1419, %v1421
        %vm1425 = vc.u32 %v1419, %v1421
        %v1426 = vadd.s32 %v1422, 1
        %v1427 = vsel %vm1425, %v1426, %v1422
        %v1428 = vadd.s32 %v1423, %v1427
        %v1429 = vadd.s32 %v1428, 536870912
        %v1430 = vshrl.u32 %v1429, 30
        %v1431 = vshll.u32 %v1430, 30
        %v1432 = vsub.s32 %v1428, %v1431
        %vm1433 = vcmp.lt.s32.totalorder %v1432, 0
        %v1434 = vsub.s32 0, %v1432
        %v1435 = vsel %vm1433, %v1434, %v1432
        %v1436 = vclz %v1435
        %v1437 = vsub.s32 %v1436, 2
        %vm1438 = vcmp.gt.s32.totalorder 0, %v1437
        %v1439 = vsel %vm1438, 0, %v1437
        %v1440 = vsub.s32 32, %v1439
        %v1441 = vshll.u32 %v1432, %v1439
        %v1442 = vshrl.u32 %v1424, %v1440
        %v1443 = vor.u32 %v1441, %v1442
        %v1444 = vsub.s32 4294967266, %v1439
        %v1445 = vadd.s32 %v1444, 127
        %v1446 = vshll.u32 %v1445, 23
        %v1447 = vor.u32 4788187, %v1446
        %v1448 = vand.u32 2147483647, %v1447
        %v1450 = vcvt.s32.f32 %v1443
        %v1451 = vmul.f32 %v1450, %v1448
        %v1452 = vxor.u32 %v1451, 2147483648
        %v1453 = vsel %vm1370, %v1452, %v1451
        %v1454 = vsub.s32 4, %v1430
        %v1455 = vsel %vm1370, %v1454, %v1430
        %v1456 = vsel %vm1369, %v330, %v1453
        %v1457 = vsel %vm1369, 0, %v1455
        %v1458 = vcosq.f32.pop %v1456
        %v1459 = vsinq.f32.pop %v1456
        %vm1460 = vweird.f32 %v330
        %v1461 = vadd.s32 %v1457, 3
        %v1462 = vand.u32 %v1461, 3
        %vm1463 = vcmp.lt.s32.totalorder %v1462, 2
        %vm1464 = vcmp.eq.s32.totalorder %v1462, 0
        %v1465 = vxor.u32 %v1459, 2147483648
        %v1466 = vsel %vm1464, %v1458, %v1465
        %vm1467 = vcmp.eq.s32.totalorder %v1462, 2
        %v1468 = vxor.u32 %v1458, 2147483648
        %v1469 = vsel %vm1467, %v1468, %v1459
        %v1470 = vsel %vm1463, %v1466, %v1469
        %v1471 = vsel %vm1460, nan, %v1470
        %v1472 = vand.u32 2147483647, %v331
        %vm1473 = vcmp.le.f32.partialorder %v1472, 0.7853982
        %vm1474 = vcmp.lt.s32.totalorder %v331, 0
        %v1475 = vand.u32 %v331, 2139095040
        %v1476 = vshrl.u32 %v1475, 23
        %v1477 = vsub.s32 %v1476, 127
        %v1478 = vand.u32 2147483647, %v331
        %v1479 = vand.u32 %v1478, 8388607
        %v1480 = vor.u32 %v1479, 8388608
        %v1481 = vsub.s32 0, %v1480
        %v1482 = vadd.s32 %v1477, 1
        %vm1483 = vcmp.gt.s32.totalorder %v1482, 0
        %v1484 = vsel %vm1483, %v1482, 0
        %v1485 = vshrl.u32 %v1484, 5
        %v1486 = vand.u32 %v1484, 31
        %v1487 = vsub.s32 32, %v1486
        %v1488 = vshrl.u32 683565275, %v1487
        %v1489 = vshll.u32 683565275, %v1486
        %v1490 = vshrl.u32 2475754826, %v1487
        %v1491 = vor.u32 %v1489, %v1490
        %v1492 = vshll.u32 2475754826, %v1486
        %v1493 = vshrl.u32 2131351028, %v1487
        %v1494 = vor.u32 %v1492, %v1493
        %v1495 = vshll.u32 2131351028, %v1486
        %v1496 = vshrl.u32 2102212464, %v1487
        %v1497 = vor.u32 %v1495, %v1496
        %v1498 = vshll.u32 2102212464, %v1486
        %v1499 = vshrl.u32 920167782, %v1487
        %v1500 = vor.u32 %v1498, %v1499
        %v1501 = vshll.u32 920167782, %v1486
        %v1502 = vshrl.u32 1326507024, %v1487
        %v1503 = vor.u32 %v1501, %v1502
        %vm1504 = vcmp.lt.s32.totalorder %v1485, 1
        %vm1505 = vcmp.lt.s32.totalorder %v1485, 2
        %vm1506 = vcmp.lt.s32.totalorder %v1485, 3
        %vm1507 = vcmp.lt.s32.totalorder %v1485, 4
        %v1508 = vsel %vm1504, %v1488, %v1491
        %v1509 = vsel %vm1507, %v1497, 2102212464
        %v1510 = vsel %vm1506, %v1494, %v1509
        %v1511 = vsel %vm1505, %v1508, %v1510
        %v1512 = vsel %vm1504, %v1491, %v1494
        %v1513 = vsel %vm1507, %v1500, 920167782
        %v1514 = vsel %vm1506, %v1497, %v1513
        %v1515 = vsel %vm1505, %v1512, %v1514
        %v1516 = vsel %vm1504, %v1494, %v1497
        %v1517 = vsel %vm1507, %v1503, 1326507024
        %v1518 = vsel %vm1506, %v1500, %v1517
        %v1519 = vsel %vm1505, %v1516, %v1518
        %v1520 = vshll.u32 %v1480, 8
        %v1521 = vmul.u32.u64.compose %v1520, %v1519
        %v1522 = vextract.low.u32 %v1521
        %v1523 = vextract.high.u32 %v1521
        %v1524 = vmul.u32.u64.compose %v1520, %v1515
        %v1525 = vextract.low.u32 %v1524
        %v1526 = vextract.high.u32 %v1524
        %v1527 = vmul.u32 %v1520, %v1511
        %v1528 = vadd.s32 %v1523, %v1525
        %vm1529 = vc.u32 %v1523, %v1525
        %v1530 = vadd.s32 %v1526, 1
        %v1531 = vsel %vm1529, %v1530, %v1526
        %v1532 = vadd.s32 %v1527, %v1531
        %v1533 = vadd.s32 %v1532, 536870912
        %v1534 = vshrl.u32 %v1533, 30
        %v1535 = vshll.u32 %v1534, 30
        %v1536 = vsub.s32 %v1532, %v1535
        %vm1537 = vcmp.lt.s32.totalorder %v1536, 0
        %v1538 = vsub.s32 0, %v1536
        %v1539 = vsel %vm1537, %v1538, %v1536
        %v1540 = vclz %v1539
        %v1541 = vsub.s32 %v1540, 2
        %vm1542 = vcmp.gt.s32.totalorder 0, %v1541
        %v1543 = vsel %vm1542, 0, %v1541
        %v1544 = vsub.s32 32, %v1543
        %v1545 = vshll.u32 %v1536, %v1543
        %v1546 = vshrl.u32 %v1528, %v1544
        %v1547 = vor.u32 %v1545, %v1546
        %v1548 = vsub.s32 4294967266, %v1543
        %v1549 = vadd.s32 %v1548, 127
        %v1550 = vshll.u32 %v1549, 23
        %v1551 = vor.u32 4788187, %v1550
        %v1552 = vand.u32 2147483647, %v1551
        %v1554 = vcvt.s32.f32 %v1547
        %v1555 = vmul.f32 %v1554, %v1552
        %v1556 = vxor.u32 %v1555, 2147483648
        %v1557 = vsel %vm1474, %v1556, %v1555
        %v1558 = vsub.s32 4, %v1534
        %v1559 = vsel %vm1474, %v1558, %v1534
        %v1560 = vsel %vm1473, %v331, %v1557
        %v1561 = vsel %vm1473, 0, %v1559
        %v1562 = vcosq.f32.pop %v1560
        %v1563 = vsinq.f32.pop %v1560
        %vm1564 = vweird.f32 %v331
        %v1565 = vadd.s32 %v1561, 3
        %v1566 = vand.u32 %v1565, 3
        %vm1567 = vcmp.lt.s32.totalorder %v1566, 2
        %vm1568 = vcmp.eq.s32.totalorder %v1566, 0
        %v1569 = vxor.u32 %v1563, 2147483648
        %v1570 = vsel %vm1568, %v1562, %v1569
        %vm1571 = vcmp.eq.s32.totalorder %v1566, 2
        %v1572 = vxor.u32 %v1562, 2147483648
        %v1573 = vsel %vm1571, %v1572, %v1563
        %v1574 = vsel %vm1567, %v1570, %v1573
        %v1575 = vsel %vm1564, nan, %v1574
        %v1576 = vand.u32 2147483647, %v332
        %vm1577 = vcmp.le.f32.partialorder %v1576, 0.7853982
        %vm1578 = vcmp.lt.s32.totalorder %v332, 0
        %v1579 = vand.u32 %v332, 2139095040
        %v1580 = vshrl.u32 %v1579, 23
        %v1581 = vsub.s32 %v1580, 127
        %v1582 = vand.u32 2147483647, %v332
        %v1583 = vand.u32 %v1582, 8388607
        %v1584 = vor.u32 %v1583, 8388608
        %v1585 = vsub.s32 0, %v1584
        %v1586 = vadd.s32 %v1581, 1
        %vm1587 = vcmp.gt.s32.totalorder %v1586, 0
        %v1588 = vsel %vm1587, %v1586, 0
        %v1589 = vshrl.u32 %v1588, 5
        %v1590 = vand.u32 %v1588, 31
        %v1591 = vsub.s32 32, %v1590
        %v1592 = vshrl.u32 683565275, %v1591
        %v1593 = vshll.u32 683565275, %v1590
        %v1594 = vshrl.u32 2475754826, %v1591
        %v1595 = vor.u32 %v1593, %v1594
        %v1596 = vshll.u32 2475754826, %v1590
        %v1597 = vshrl.u32 2131351028, %v1591
        %v1598 = vor.u32 %v1596, %v1597
        %v1599 = vshll.u32 2131351028, %v1590
        %v1600 = vshrl.u32 2102212464, %v1591
        %v1601 = vor.u32 %v1599, %v1600
        %v1602 = vshll.u32 2102212464, %v1590
        %v1603 = vshrl.u32 920167782, %v1591
        %v1604 = vor.u32 %v1602, %v1603
        %v1605 = vshll.u32 920167782, %v1590
        %v1606 = vshrl.u32 1326507024, %v1591
        %v1607 = vor.u32 %v1605, %v1606
        %vm1608 = vcmp.lt.s32.totalorder %v1589, 1
        %vm1609 = vcmp.lt.s32.totalorder %v1589, 2
        %vm1610 = vcmp.lt.s32.totalorder %v1589, 3
        %vm1611 = vcmp.lt.s32.totalorder %v1589, 4
        %v1612 = vsel %vm1608, %v1592, %v1595
        %v1613 = vsel %vm1611, %v1601, 2102212464
        %v1614 = vsel %vm1610, %v1598, %v1613
        %v1615 = vsel %vm1609, %v1612, %v1614
        %v1616 = vsel %vm1608, %v1595, %v1598
        %v1617 = vsel %vm1611, %v1604, 920167782
        %v1618 = vsel %vm1610, %v1601, %v1617
        %v1619 = vsel %vm1609, %v1616, %v1618
        %v1620 = vsel %vm1608, %v1598, %v1601
        %v1621 = vsel %vm1611, %v1607, 1326507024
        %v1622 = vsel %vm1610, %v1604, %v1621
        %v1623 = vsel %vm1609, %v1620, %v1622
        %v1624 = vshll.u32 %v1584, 8
        %v1625 = vmul.u32.u64.compose %v1624, %v1623
        %v1626 = vextract.low.u32 %v1625
        %v1627 = vextract.high.u32 %v1625
        %v1628 = vmul.u32.u64.compose %v1624, %v1619
        %v1629 = vextract.low.u32 %v1628
        %v1630 = vextract.high.u32 %v1628
        %v1631 = vmul.u32 %v1624, %v1615
        %v1632 = vadd.s32 %v1627, %v1629
        %vm1633 = vc.u32 %v1627, %v1629
        %v1634 = vadd.s32 %v1630, 1
        %v1635 = vsel %vm1633, %v1634, %v1630
        %v1636 = vadd.s32 %v1631, %v1635
        %v1637 = vadd.s32 %v1636, 536870912
        %v1638 = vshrl.u32 %v1637, 30
        %v1639 = vshll.u32 %v1638, 30
        %v1640 = vsub.s32 %v1636, %v1639
        %vm1641 = vcmp.lt.s32.totalorder %v1640, 0
        %v1642 = vsub.s32 0, %v1640
        %v1643 = vsel %vm1641, %v1642, %v1640
        %v1644 = vclz %v1643
        %v1645 = vsub.s32 %v1644, 2
        %vm1646 = vcmp.gt.s32.totalorder 0, %v1645
        %v1647 = vsel %vm1646, 0, %v1645
        %v1648 = vsub.s32 32, %v1647
        %v1649 = vshll.u32 %v1640, %v1647
        %v1650 = vshrl.u32 %v1632, %v1648
        %v1651 = vor.u32 %v1649, %v1650
        %v1652 = vsub.s32 4294967266, %v1647
        %v1653 = vadd.s32 %v1652, 127
        %v1654 = vshll.u32 %v1653, 23
        %v1655 = vor.u32 4788187, %v1654
        %v1656 = vand.u32 2147483647, %v1655
        %v1658 = vcvt.s32.f32 %v1651
        %v1659 = vmul.f32 %v1658, %v1656
        %v1660 = vxor.u32 %v1659, 2147483648
        %v1661 = vsel %vm1578, %v1660, %v1659
        %v1662 = vsub.s32 4, %v1638
        %v1663 = vsel %vm1578, %v1662, %v1638
        %v1664 = vsel %vm1577, %v332, %v1661
        %v1665 = vsel %vm1577, 0, %v1663
        %v1666 = vcosq.f32.pop %v1664
        %v1667 = vsinq.f32.pop %v1664
        %vm1668 = vweird.f32 %v332
        %v1669 = vadd.s32 %v1665, 3
        %v1670 = vand.u32 %v1669, 3
        %vm1671 = vcmp.lt.s32.totalorder %v1670, 2
        %vm1672 = vcmp.eq.s32.totalorder %v1670, 0
        %v1673 = vxor.u32 %v1667, 2147483648
        %v1674 = vsel %vm1672, %v1666, %v1673
        %vm1675 = vcmp.eq.s32.totalorder %v1670, 2
        %v1676 = vxor.u32 %v1666, 2147483648
        %v1677 = vsel %vm1675, %v1676, %v1667
        %v1678 = vsel %vm1671, %v1674, %v1677
        %v1679 = vsel %vm1668, nan, %v1678
        %v1680 = vand.u32 2147483647, %v333
        %vm1681 = vcmp.le.f32.partialorder %v1680, 0.7853982
        %vm1682 = vcmp.lt.s32.totalorder %v333, 0
        %v1683 = vand.u32 %v333, 2139095040
        %v1684 = vshrl.u32 %v1683, 23
        %v1685 = vsub.s32 %v1684, 127
        %v1686 = vand.u32 2147483647, %v333
        %v1687 = vand.u32 %v1686, 8388607
        %v1688 = vor.u32 %v1687, 8388608
        %v1689 = vsub.s32 0, %v1688
        %v1690 = vadd.s32 %v1685, 1
        %vm1691 = vcmp.gt.s32.totalorder %v1690, 0
        %v1692 = vsel %vm1691, %v1690, 0
        %v1693 = vshrl.u32 %v1692, 5
        %v1694 = vand.u32 %v1692, 31
        %v1695 = vsub.s32 32, %v1694
        %v1696 = vshrl.u32 683565275, %v1695
        %v1697 = vshll.u32 683565275, %v1694
        %v1698 = vshrl.u32 2475754826, %v1695
        %v1699 = vor.u32 %v1697, %v1698
        %v1700 = vshll.u32 2475754826, %v1694
        %v1701 = vshrl.u32 2131351028, %v1695
        %v1702 = vor.u32 %v1700, %v1701
        %v1703 = vshll.u32 2131351028, %v1694
        %v1704 = vshrl.u32 2102212464, %v1695
        %v1705 = vor.u32 %v1703, %v1704
        %v1706 = vshll.u32 2102212464, %v1694
        %v1707 = vshrl.u32 920167782, %v1695
        %v1708 = vor.u32 %v1706, %v1707
        %v1709 = vshll.u32 920167782, %v1694
        %v1710 = vshrl.u32 1326507024, %v1695
        %v1711 = vor.u32 %v1709, %v1710
        %vm1712 = vcmp.lt.s32.totalorder %v1693, 1
        %vm1713 = vcmp.lt.s32.totalorder %v1693, 2
        %vm1714 = vcmp.lt.s32.totalorder %v1693, 3
        %vm1715 = vcmp.lt.s32.totalorder %v1693, 4
        %v1716 = vsel %vm1712, %v1696, %v1699
        %v1717 = vsel %vm1715, %v1705, 2102212464
        %v1718 = vsel %vm1714, %v1702, %v1717
        %v1719 = vsel %vm1713, %v1716, %v1718
        %v1720 = vsel %vm1712, %v1699, %v1702
        %v1721 = vsel %vm1715, %v1708, 920167782
        %v1722 = vsel %vm1714, %v1705, %v1721
        %v1723 = vsel %vm1713, %v1720, %v1722
        %v1724 = vsel %vm1712, %v1702, %v1705
        %v1725 = vsel %vm1715, %v1711, 1326507024
        %v1726 = vsel %vm1714, %v1708, %v1725
        %v1727 = vsel %vm1713, %v1724, %v1726
        %v1728 = vshll.u32 %v1688, 8
        %v1729 = vmul.u32.u64.compose %v1728, %v1727
        %v1730 = vextract.low.u32 %v1729
        %v1731 = vextract.high.u32 %v1729
        %v1732 = vmul.u32.u64.compose %v1728, %v1723
        %v1733 = vextract.low.u32 %v1732
        %v1734 = vextract.high.u32 %v1732
        %v1735 = vmul.u32 %v1728, %v1719
        %v1736 = vadd.s32 %v1731, %v1733
        %vm1737 = vc.u32 %v1731, %v1733
        %v1738 = vadd.s32 %v1734, 1
        %v1739 = vsel %vm1737, %v1738, %v1734
        %v1740 = vadd.s32 %v1735, %v1739
        %v1741 = vadd.s32 %v1740, 536870912
        %v1742 = vshrl.u32 %v1741, 30
        %v1743 = vshll.u32 %v1742, 30
        %v1744 = vsub.s32 %v1740, %v1743
        %vm1745 = vcmp.lt.s32.totalorder %v1744, 0
        %v1746 = vsub.s32 0, %v1744
        %v1747 = vsel %vm1745, %v1746, %v1744
        %v1748 = vclz %v1747
        %v1749 = vsub.s32 %v1748, 2
        %vm1750 = vcmp.gt.s32.totalorder 0, %v1749
        %v1751 = vsel %vm1750, 0, %v1749
        %v1752 = vsub.s32 32, %v1751
        %v1753 = vshll.u32 %v1744, %v1751
        %v1754 = vshrl.u32 %v1736, %v1752
        %v1755 = vor.u32 %v1753, %v1754
        %v1756 = vsub.s32 4294967266, %v1751
        %v1757 = vadd.s32 %v1756, 127
        %v1758 = vshll.u32 %v1757, 23
        %v1759 = vor.u32 4788187, %v1758
        %v1760 = vand.u32 2147483647, %v1759
        %v1762 = vcvt.s32.f32 %v1755
        %v1763 = vmul.f32 %v1762, %v1760
        %v1764 = vxor.u32 %v1763, 2147483648
        %v1765 = vsel %vm1682, %v1764, %v1763
        %v1766 = vsub.s32 4, %v1742
        %v1767 = vsel %vm1682, %v1766, %v1742
        %v1768 = vsel %vm1681, %v333, %v1765
        %v1769 = vsel %vm1681, 0, %v1767
        %v1770 = vcosq.f32.pop %v1768
        %v1771 = vsinq.f32.pop %v1768
        %vm1772 = vweird.f32 %v333
        %v1773 = vadd.s32 %v1769, 3
        %v1774 = vand.u32 %v1773, 3
        %vm1775 = vcmp.lt.s32.totalorder %v1774, 2
        %vm1776 = vcmp.eq.s32.totalorder %v1774, 0
        %v1777 = vxor.u32 %v1771, 2147483648
        %v1778 = vsel %vm1776, %v1770, %v1777
        %vm1779 = vcmp.eq.s32.totalorder %v1774, 2
        %v1780 = vxor.u32 %v1770, 2147483648
        %v1781 = vsel %vm1779, %v1780, %v1771
        %v1782 = vsel %vm1775, %v1778, %v1781
        %v1783 = vsel %vm1772, nan, %v1782
        %v1784 = vand.u32 2147483647, %v334
        %vm1785 = vcmp.le.f32.partialorder %v1784, 0.7853982
        %vm1786 = vcmp.lt.s32.totalorder %v334, 0
        %v1787 = vand.u32 %v334, 2139095040
        %v1788 = vshrl.u32 %v1787, 23
        %v1789 = vsub.s32 %v1788, 127
        %v1790 = vand.u32 2147483647, %v334
        %v1791 = vand.u32 %v1790, 8388607
        %v1792 = vor.u32 %v1791, 8388608
        %v1793 = vsub.s32 0, %v1792
        %v1794 = vadd.s32 %v1789, 1
        %vm1795 = vcmp.gt.s32.totalorder %v1794, 0
        %v1796 = vsel %vm1795, %v1794, 0
        %v1797 = vshrl.u32 %v1796, 5
        %v1798 = vand.u32 %v1796, 31
        %v1799 = vsub.s32 32, %v1798
        %v1800 = vshrl.u32 683565275, %v1799
        %v1801 = vshll.u32 683565275, %v1798
        %v1802 = vshrl.u32 2475754826, %v1799
        %v1803 = vor.u32 %v1801, %v1802
        %v1804 = vshll.u32 2475754826, %v1798
        %v1805 = vshrl.u32 2131351028, %v1799
        %v1806 = vor.u32 %v1804, %v1805
        %v1807 = vshll.u32 2131351028, %v1798
        %v1808 = vshrl.u32 2102212464, %v1799
        %v1809 = vor.u32 %v1807, %v1808
        %v1810 = vshll.u32 2102212464, %v1798
        %v1811 = vshrl.u32 920167782, %v1799
        %v1812 = vor.u32 %v1810, %v1811
        %v1813 = vshll.u32 920167782, %v1798
        %v1814 = vshrl.u32 1326507024, %v1799
        %v1815 = vor.u32 %v1813, %v1814
        %vm1816 = vcmp.lt.s32.totalorder %v1797, 1
        %vm1817 = vcmp.lt.s32.totalorder %v1797, 2
        %vm1818 = vcmp.lt.s32.totalorder %v1797, 3
        %vm1819 = vcmp.lt.s32.totalorder %v1797, 4
        %v1820 = vsel %vm1816, %v1800, %v1803
        %v1821 = vsel %vm1819, %v1809, 2102212464
        %v1822 = vsel %vm1818, %v1806, %v1821
        %v1823 = vsel %vm1817, %v1820, %v1822
        %v1824 = vsel %vm1816, %v1803, %v1806
        %v1825 = vsel %vm1819, %v1812, 920167782
        %v1826 = vsel %vm1818, %v1809, %v1825
        %v1827 = vsel %vm1817, %v1824, %v1826
        %v1828 = vsel %vm1816, %v1806, %v1809
        %v1829 = vsel %vm1819, %v1815, 1326507024
        %v1830 = vsel %vm1818, %v1812, %v1829
        %v1831 = vsel %vm1817, %v1828, %v1830
        %v1832 = vshll.u32 %v1792, 8
        %v1833 = vmul.u32.u64.compose %v1832, %v1831
        %v1834 = vextract.low.u32 %v1833
        %v1835 = vextract.high.u32 %v1833
        %v1836 = vmul.u32.u64.compose %v1832, %v1827
        %v1837 = vextract.low.u32 %v1836
        %v1838 = vextract.high.u32 %v1836
        %v1839 = vmul.u32 %v1832, %v1823
        %v1840 = vadd.s32 %v1835, %v1837
        %vm1841 = vc.u32 %v1835, %v1837
        %v1842 = vadd.s32 %v1838, 1
        %v1843 = vsel %vm1841, %v1842, %v1838
        %v1844 = vadd.s32 %v1839, %v1843
        %v1845 = vadd.s32 %v1844, 536870912
        %v1846 = vshrl.u32 %v1845, 30
        %v1847 = vshll.u32 %v1846, 30
        %v1848 = vsub.s32 %v1844, %v1847
        %vm1849 = vcmp.lt.s32.totalorder %v1848, 0
        %v1850 = vsub.s32 0, %v1848
        %v1851 = vsel %vm1849, %v1850, %v1848
        %v1852 = vclz %v1851
        %v1853 = vsub.s32 %v1852, 2
        %vm1854 = vcmp.gt.s32.totalorder 0, %v1853
        %v1855 = vsel %vm1854, 0, %v1853
        %v1856 = vsub.s32 32, %v1855
        %v1857 = vshll.u32 %v1848, %v1855
        %v1858 = vshrl.u32 %v1840, %v1856
        %v1859 = vor.u32 %v1857, %v1858
        %v1860 = vsub.s32 4294967266, %v1855
        %v1861 = vadd.s32 %v1860, 127
        %v1862 = vshll.u32 %v1861, 23
        %v1863 = vor.u32 4788187, %v1862
        %v1864 = vand.u32 2147483647, %v1863
        %v1866 = vcvt.s32.f32 %v1859
        %v1867 = vmul.f32 %v1866, %v1864
        %v1868 = vxor.u32 %v1867, 2147483648
        %v1869 = vsel %vm1786, %v1868, %v1867
        %v1870 = vsub.s32 4, %v1846
        %v1871 = vsel %vm1786, %v1870, %v1846
        %v1872 = vsel %vm1785, %v334, %v1869
        %v1873 = vsel %vm1785, 0, %v1871
        %v1874 = vcosq.f32.pop %v1872
        %v1875 = vsinq.f32.pop %v1872
        %vm1876 = vweird.f32 %v334
        %v1877 = vadd.s32 %v1873, 3
        %v1878 = vand.u32 %v1877, 3
        %vm1879 = vcmp.lt.s32.totalorder %v1878, 2
        %vm1880 = vcmp.eq.s32.totalorder %v1878, 0
        %v1881 = vxor.u32 %v1875, 2147483648
        %v1882 = vsel %vm1880, %v1874, %v1881
        %vm1883 = vcmp.eq.s32.totalorder %v1878, 2
        %v1884 = vxor.u32 %v1874, 2147483648
        %v1885 = vsel %vm1883, %v1884, %v1875
        %v1886 = vsel %vm1879, %v1882, %v1885
        %v1887 = vsel %vm1876, nan, %v1886
        %v1888 = vand.u32 2147483647, %v335
        %vm1889 = vcmp.le.f32.partialorder %v1888, 0.7853982
        %vm1890 = vcmp.lt.s32.totalorder %v335, 0
        %v1891 = vand.u32 %v335, 2139095040
        %v1892 = vshrl.u32 %v1891, 23
        %v1893 = vsub.s32 %v1892, 127
        %v1894 = vand.u32 2147483647, %v335
        %v1895 = vand.u32 %v1894, 8388607
        %v1896 = vor.u32 %v1895, 8388608
        %v1897 = vsub.s32 0, %v1896
        %v1898 = vadd.s32 %v1893, 1
        %vm1899 = vcmp.gt.s32.totalorder %v1898, 0
        %v1900 = vsel %vm1899, %v1898, 0
        %v1901 = vshrl.u32 %v1900, 5
        %v1902 = vand.u32 %v1900, 31
        %v1903 = vsub.s32 32, %v1902
        %v1904 = vshrl.u32 683565275, %v1903
        %v1905 = vshll.u32 683565275, %v1902
        %v1906 = vshrl.u32 2475754826, %v1903
        %v1907 = vor.u32 %v1905, %v1906
        %v1908 = vshll.u32 2475754826, %v1902
        %v1909 = vshrl.u32 2131351028, %v1903
        %v1910 = vor.u32 %v1908, %v1909
        %v1911 = vshll.u32 2131351028, %v1902
        %v1912 = vshrl.u32 2102212464, %v1903
        %v1913 = vor.u32 %v1911, %v1912
        %v1914 = vshll.u32 2102212464, %v1902
        %v1915 = vshrl.u32 920167782, %v1903
        %v1916 = vor.u32 %v1914, %v1915
        %v1917 = vshll.u32 920167782, %v1902
        %v1918 = vshrl.u32 1326507024, %v1903
        %v1919 = vor.u32 %v1917, %v1918
        %vm1920 = vcmp.lt.s32.totalorder %v1901, 1
        %vm1921 = vcmp.lt.s32.totalorder %v1901, 2
        %vm1922 = vcmp.lt.s32.totalorder %v1901, 3
        %vm1923 = vcmp.lt.s32.totalorder %v1901, 4
        %v1924 = vsel %vm1920, %v1904, %v1907
        %v1925 = vsel %vm1923, %v1913, 2102212464
        %v1926 = vsel %vm1922, %v1910, %v1925
        %v1927 = vsel %vm1921, %v1924, %v1926
        %v1928 = vsel %vm1920, %v1907, %v1910
        %v1929 = vsel %vm1923, %v1916, 920167782
        %v1930 = vsel %vm1922, %v1913, %v1929
        %v1931 = vsel %vm1921, %v1928, %v1930
        %v1932 = vsel %vm1920, %v1910, %v1913
        %v1933 = vsel %vm1923, %v1919, 1326507024
        %v1934 = vsel %vm1922, %v1916, %v1933
        %v1935 = vsel %vm1921, %v1932, %v1934
        %v1936 = vshll.u32 %v1896, 8
        %v1937 = vmul.u32.u64.compose %v1936, %v1935
        %v1938 = vextract.low.u32 %v1937
        %v1939 = vextract.high.u32 %v1937
        %v1940 = vmul.u32.u64.compose %v1936, %v1931
        %v1941 = vextract.low.u32 %v1940
        %v1942 = vextract.high.u32 %v1940
        %v1943 = vmul.u32 %v1936, %v1927
        %v1944 = vadd.s32 %v1939, %v1941
        %vm1945 = vc.u32 %v1939, %v1941
        %v1946 = vadd.s32 %v1942, 1
        %v1947 = vsel %vm1945, %v1946, %v1942
        %v1948 = vadd.s32 %v1943, %v1947
        %v1949 = vadd.s32 %v1948, 536870912
        %v1950 = vshrl.u32 %v1949, 30
        %v1951 = vshll.u32 %v1950, 30
        %v1952 = vsub.s32 %v1948, %v1951
        %vm1953 = vcmp.lt.s32.totalorder %v1952, 0
        %v1954 = vsub.s32 0, %v1952
        %v1955 = vsel %vm1953, %v1954, %v1952
        %v1956 = vclz %v1955
        %v1957 = vsub.s32 %v1956, 2
        %vm1958 = vcmp.gt.s32.totalorder 0, %v1957
        %v1959 = vsel %vm1958, 0, %v1957
        %v1960 = vsub.s32 32, %v1959
        %v1961 = vshll.u32 %v1952, %v1959
        %v1962 = vshrl.u32 %v1944, %v1960
        %v1963 = vor.u32 %v1961, %v1962
        %v1964 = vsub.s32 4294967266, %v1959
        %v1965 = vadd.s32 %v1964, 127
        %v1966 = vshll.u32 %v1965, 23
        %v1967 = vor.u32 4788187, %v1966
        %v1968 = vand.u32 2147483647, %v1967
        %v1970 = vcvt.s32.f32 %v1963
        %v1971 = vmul.f32 %v1970, %v1968
        %v1972 = vxor.u32 %v1971, 2147483648
        %v1973 = vsel %vm1890, %v1972, %v1971
        %v1974 = vsub.s32 4, %v1950
        %v1975 = vsel %vm1890, %v1974, %v1950
        %v1976 = vsel %vm1889, %v335, %v1973
        %v1977 = vsel %vm1889, 0, %v1975
        %v1978 = vcosq.f32.pop %v1976
        %v1979 = vsinq.f32.pop %v1976
        %vm1980 = vweird.f32 %v335
        %v1981 = vadd.s32 %v1977, 3
        %v1982 = vand.u32 %v1981, 3
        %vm1983 = vcmp.lt.s32.totalorder %v1982, 2
        %vm1984 = vcmp.eq.s32.totalorder %v1982, 0
        %v1985 = vxor.u32 %v1979, 2147483648
        %v1986 = vsel %vm1984, %v1978, %v1985
        %vm1987 = vcmp.eq.s32.totalorder %v1982, 2
        %v1988 = vxor.u32 %v1978, 2147483648
        %v1989 = vsel %vm1987, %v1988, %v1979
        %v1990 = vsel %vm1983, %v1986, %v1989
        %v1991 = vsel %vm1980, nan, %v1990
        %1992 = vrot.lane.b32.xlu0 %v438, 64
        %v1993 = vpop.permute.xlu0 %1992
        %1994 = vrot.lane.b32.xlu0 %v541, 64
        %v1995 = vpop.permute.xlu0 %1994
        %1996 = vrot.lane.b32.xlu0 %v644, 64
        %v1997 = vpop.permute.xlu0 %1996
        %1998 = vrot.lane.b32.xlu0 %v747, 64
        %v1999 = vpop.permute.xlu0 %1998
        %2000 = vrot.lane.b32.xlu0 %v850, 64
        %v2001 = vpop.permute.xlu0 %2000
        %2002 = vrot.lane.b32.xlu0 %v953, 64
        %v2003 = vpop.permute.xlu0 %2002
        %2004 = vrot.lane.b32.xlu0 %v1056, 64
        %v2005 = vpop.permute.xlu0 %2004
        %2006 = vrot.lane.b32.xlu0 %v1159, 64
        %v2007 = vpop.permute.xlu0 %2006
        %2008 = vrot.lane.b32.xlu0 %v1263, 64
        %v2009 = vpop.permute.xlu0 %2008
        %2010 = vrot.lane.b32.xlu0 %v1367, 64
        %v2011 = vpop.permute.xlu0 %2010
        %2012 = vrot.lane.b32.xlu0 %v1471, 64
        %v2013 = vpop.permute.xlu0 %2012
        %2014 = vrot.lane.b32.xlu0 %v1575, 64
        %v2015 = vpop.permute.xlu0 %2014
        %2016 = vrot.lane.b32.xlu0 %v1679, 64
        %v2017 = vpop.permute.xlu0 %2016
        %2018 = vrot.lane.b32.xlu0 %v1783, 64
        %v2019 = vpop.permute.xlu0 %2018
        %2020 = vrot.lane.b32.xlu0 %v1887, 64
        %v2021 = vpop.permute.xlu0 %2020
        %2022 = vrot.lane.b32.xlu0 %v1991, 64
        %v2023 = vpop.permute.xlu0 %2022
        %v2024 = vsel %vm233, %v438, %v1993
        %v2025 = vsel %vm233, %v541, %v1995
        %v2026 = vsel %vm233, %v644, %v1997
        %v2027 = vsel %vm233, %v747, %v1999
        %v2028 = vsel %vm233, %v850, %v2001
        %v2029 = vsel %vm233, %v953, %v2003
        %v2030 = vsel %vm233, %v1056, %v2005
        %v2031 = vsel %vm233, %v1159, %v2007
        %2032 = vst [vmem:[%s194] sm:$0xff] %v2024
        %2033 = vst [vmem:[%s194 + $0x8] sm:$0xff] %v2025
        %2034 = vst [vmem:[%s194 + $0x10] sm:$0xff] %v2026
        %2035 = vst [vmem:[%s194 + $0x18] sm:$0xff] %v2027
        %2036 = vst [vmem:[%s194 + $0x20] sm:$0xff] %v2028
        %2037 = vst [vmem:[%s194 + $0x28] sm:$0xff] %v2029
        %2038 = vst [vmem:[%s194 + $0x30] sm:$0xff] %v2030
        %2039 = vst [vmem:[%s194 + $0x38] sm:$0xff] %v2031
        %v2040 = vsel %vm233, %v1993, %v438
        %v2041 = vsel %vm233, %v1995, %v541
        %v2042 = vsel %vm233, %v1997, %v644
        %v2043 = vsel %vm233, %v1999, %v747
        %v2044 = vsel %vm233, %v2001, %v850
        %v2045 = vsel %vm233, %v2003, %v953
        %v2046 = vsel %vm233, %v2005, %v1056
        %v2047 = vsel %vm233, %v2007, %v1159
        %2048 = vst [vmem:[%s194 + $0x40] sm:$0xff] %v2040
        %2049 = vst [vmem:[%s194 + $0x48] sm:$0xff] %v2041
        %2050 = vst [vmem:[%s194 + $0x50] sm:$0xff] %v2042
        %2051 = vst [vmem:[%s194 + $0x58] sm:$0xff] %v2043
        %2052 = vst [vmem:[%s194 + $0x60] sm:$0xff] %v2044
        %2053 = vst [vmem:[%s194 + $0x68] sm:$0xff] %v2045
        %2054 = vst [vmem:[%s194 + $0x70] sm:$0xff] %v2046
        %2055 = vst [vmem:[%s194 + $0x78] sm:$0xff] %v2047
        %v2056 = vsel %vm233, %v1263, %v2009
        %v2057 = vsel %vm233, %v1367, %v2011
        %v2058 = vsel %vm233, %v1471, %v2013
        %v2059 = vsel %vm233, %v1575, %v2015
        %v2060 = vsel %vm233, %v1679, %v2017
        %v2061 = vsel %vm233, %v1783, %v2019
        %v2062 = vsel %vm233, %v1887, %v2021
        %v2063 = vsel %vm233, %v1991, %v2023
        %2064 = vst [vmem:[%s201] sm:$0xff] %v2056
        %2065 = vst [vmem:[%s201 + $0x8] sm:$0xff] %v2057
        %2066 = vst [vmem:[%s201 + $0x10] sm:$0xff] %v2058
        %2067 = vst [vmem:[%s201 + $0x18] sm:$0xff] %v2059
        %2068 = vst [vmem:[%s201 + $0x20] sm:$0xff] %v2060
        %2069 = vst [vmem:[%s201 + $0x28] sm:$0xff] %v2061
        %2070 = vst [vmem:[%s201 + $0x30] sm:$0xff] %v2062
        %2071 = vst [vmem:[%s201 + $0x38] sm:$0xff] %v2063
        %v2072 = vsel %vm233, %v2009, %v1263
        %v2073 = vsel %vm233, %v2011, %v1367
        %v2074 = vsel %vm233, %v2013, %v1471
        %v2075 = vsel %vm233, %v2015, %v1575
        %v2076 = vsel %vm233, %v2017, %v1679
        %v2077 = vsel %vm233, %v2019, %v1783
        %v2078 = vsel %vm233, %v2021, %v1887
        %v2079 = vsel %vm233, %v2023, %v1991
        %2080 = vst [vmem:[%s201 + $0x40] sm:$0xff] %v2072
        %2081 = vst [vmem:[%s201 + $0x48] sm:$0xff] %v2073
        %2082 = vst [vmem:[%s201 + $0x50] sm:$0xff] %v2074
        %2083 = vst [vmem:[%s201 + $0x58] sm:$0xff] %v2075
        %2084 = vst [vmem:[%s201 + $0x60] sm:$0xff] %v2076
        %2085 = vst [vmem:[%s201 + $0x68] sm:$0xff] %v2077
        %2086 = vst [vmem:[%s201 + $0x70] sm:$0xff] %v2078
        %2087 = vst [vmem:[%s201 + $0x78] sm:$0xff] %v2079
        %s2088 = sand.u32 %s92, 1
        %s2089 = scalar_lea.sflag [#allocation3], %s2088
        %s2090 = sand.u32 %s92, 1
        %s2091 = smul.addr %s2090, 128
        %s2092 = scalar_lea.vmem [#allocation2], %s2091
        %s2093 = sand.u32 %s120, 1
        %s2094 = scalar_lea.sflag [#allocation5], %s2093
        %s2095 = sand.u32 %s120, 1
        %s2096 = smul.addr %s2095, 128
        %s2097 = scalar_lea.vmem [#allocation4], %s2096
        // Predicated region
        $region29: #{tpu_custom_call.1} parent=27 // pred_check
          %p2098 = pneg %p102
        $region30: #{tpu_custom_call.1} parent=27 // pred_check_branch
          %2100 = sbr.rel (%p2098) target = $region32
        $region31: #{tpu_custom_call.1} parent=27 // pred_region
          %s2101 = smul.u32 16, %s26
          %s2103 = ssub.s32 2048, 2048
          %2104 = vsyncadd %s2089, %s2103
          %s2105 = smul.addr %s25, 16
          %s2106 = sadd.s32 %s2101, %s2105
          %s2107 = smul.addr %s2106, 128
          %s2108 = scalar_lea.hbm %s2, %s2107
          %s2109 = sshll.u32 %s2092, 4
          %s2110 = int_to_ptr.vmem [resolvable:$true] %s2109
          %2115 = dma.vmem_to_hbm [thread:$0]  %s2110, 2048, %s2108, %s2089, 128, 128, 8
        $region32: #{tpu_custom_call.1} parent=27 // pred_fallthru
          _
        // Predicated region
        $region33: #{tpu_custom_call.1} parent=27 // pred_check
          %p2116 = pneg %p130
        $region34: #{tpu_custom_call.1} parent=27 // pred_check_branch
          %2118 = sbr.rel (%p2116) target = $region36
        $region35: #{tpu_custom_call.1} parent=27 // pred_region
          %s2119 = smul.u32 16, %s26
          %s2121 = ssub.s32 2048, 2048
          %2122 = vsyncadd %s2094, %s2121
          %s2123 = smul.addr %s25, 16
          %s2124 = sadd.s32 %s2119, %s2123
          %s2125 = smul.addr %s2124, 128
          %s2126 = scalar_lea.hbm %s3, %s2125
          %s2127 = sshll.u32 %s2097, 4
          %s2128 = int_to_ptr.vmem [resolvable:$true] %s2127
          %2133 = dma.vmem_to_hbm [thread:$0]  %s2128, 2048, %s2126, %s2094, 128, 128, 8
        $region36: #{tpu_custom_call.1} parent=27 // pred_fallthru
          _
      $region28: #{tpu_custom_call.1} parent=5 // pred_fallthru
        _
      %p2134 = scmp.le.s32.totalorder 2, %s16
      // Predicated region
      $region37: #{tpu_custom_call.1} parent=5 // pred_check
        %p2135 = pneg %p2134
      $region38: #{tpu_custom_call.1} parent=5 // pred_check_branch
        %2137 = sbr.rel (%p2135) target = $region40
      $region39: #{tpu_custom_call.1} parent=5 // pred_region
        %s2138 = ssub.s32 %s16, 2
        // Predicated region
        $region41: #{tpu_custom_call.1} parent=39 // pred_check
          %p2139 = pneg %p108
        $region42: #{tpu_custom_call.1} parent=39 // pred_check_branch
          %2141 = sbr.rel (%p2139) target = $region44
        $region43: #{tpu_custom_call.1} parent=39 // pred_region
          %s2142 = sand.u32 %s93, 1
          %s2143 = scalar_lea.sflag [#allocation3], %s2142
          %s2144 = sand.u32 %s93, 1
          %s2145 = smul.addr %s2144, 128
          %s2146 = scalar_lea.vmem [#allocation2], %s2145
          %2147 = dma.done %s2143, 2048
        $region44: #{tpu_custom_call.1} parent=39 // pred_fallthru
          _
        // Predicated region
        $region45: #{tpu_custom_call.1} parent=39 // pred_check
          %p2148 = pneg %p136
        $region46: #{tpu_custom_call.1} parent=39 // pred_check_branch
          %2150 = sbr.rel (%p2148) target = $region48
        $region47: #{tpu_custom_call.1} parent=39 // pred_region
          %s2151 = sand.u32 %s121, 1
          %s2152 = scalar_lea.sflag [#allocation5], %s2151
          %s2153 = sand.u32 %s121, 1
          %s2154 = smul.addr %s2153, 128
          %s2155 = scalar_lea.vmem [#allocation4], %s2154
          %2156 = dma.done %s2152, 2048
        $region48: #{tpu_custom_call.1} parent=39 // pred_fallthru
          _
      $region40: #{tpu_custom_call.1} parent=5 // pred_fallthru
        _
    $region6: #{tpu_custom_call.1} parent=1 // loop_footer
      %s20 = sadd.s32 1, %s16
    $region7: #{tpu_custom_call.1} parent=1 // loop_footer_branch
      %15 = sbr.rel target = $region3
    $region8: #{tpu_custom_call.1} parent=1 // loop_exit
      _
    %2157 = vsyncpa [#allocation3], 1
    %s2158 = scalar_lea.sflag [#allocation3], 1
    %2159 = vsyncpa %s2158, 1
    %2160 = vsyncpa [#allocation5], 1
    %s2161 = scalar_lea.sflag [#allocation5], 1
    %2162 = vsyncpa %s2161, 1

</llo_original>
